<compile_context>
chip_gen: v5e
topology: v5e:2x2
jax: 0.10.0
libtpu: 0.0.40
codegen_flags: <defaults>
</compile_context>

<pallas_src>
import math

import jax
import jax.numpy as jnp
from jax.experimental import pallas as pl
from jax.experimental.pallas import tpu as pltpu


# ---------------------------------------------------------------------------
# Small static helpers (wrapper side).
# ---------------------------------------------------------------------------
def _round_up(x, m):
    return ((x + m - 1) // m) * m


def _pick_batch_tile(b, max_tile=8):
    """Largest divisor of b that is <= max_tile while keeping >= 2 grid steps."""
    best = 1
    for d in range(1, min(b, max_tile) + 1):
        if b % d == 0 and (b // d >= 2 or b == 1):
            best = d
    return best


def _pick_node_tile(n, max_tile=256):
    """Largest multiple-of-8 divisor of n that is <= max_tile (fallback: full n)."""
    best = n
    for t in range(8, min(n, max_tile) + 1, 8):
        if n % t == 0:
            best = t
    return best


def _toeplitz_conv(w, b, t_in, seg):
    """Expand cross-correlation taps into a block-Toeplitz matmul weight.

    w: (K, Cin, Cout), b: (Cout,)  ->  W: (t_in*Cin, seg), bias: (seg,)
    such that (x_lane @ W + bias)[:, t*Cout + c] = conv(x)[t, c]  for t < t_out,
    with zero padding in columns [t_out*Cout, seg).
    """
    K, cin, cout = w.shape
    t_out = t_in - K + 1
    cols = []
    for t in range(t_out):
        blk = jnp.zeros((t_in, cin, cout), w.dtype).at[t:t + K].set(w)
        cols.append(blk.reshape(t_in * cin, cout))
    W = jnp.concatenate(cols, axis=1)                      # (t_in*Cin, t_out*Cout)
    bias = jnp.tile(b, t_out)                              # (t_out*Cout,)
    pad = seg - t_out * cout
    W = jnp.pad(W, ((0, 0), (0, pad)))
    bias = jnp.pad(bias, (0, pad))
    return W, bias


def _pack_roles(w_roles, b_roles, t_in, seg):
    """Pack conv1|conv2|conv3 Toeplitz weights side by side (3 * seg columns)."""
    ws, bs = [], []
    for r in range(3):
        W, bias = _toeplitz_conv(w_roles[r], b_roles[r], t_in, seg)
        ws.append(W)
        bs.append(bias)
    return jnp.concatenate(ws, axis=1), jnp.concatenate(bs)[None, :]


# ---------------------------------------------------------------------------
# Kernel 1: fused  B_TCN -> Theta1 -> A_hat -> relu -> B_TCN  for one batch tile.
# Everything stays lane-dense; the only vector ops besides 4 matmuls are VPU/EUP
# elementwise (sigmoid/relu) and two lane reductions for the BN partial sums.
# ---------------------------------------------------------------------------
def _tcn_fused_kernel(x_ref, ak_ref, w1_ref, b1_ref, th_ref, w2_ref, b2_ref,
                      o_ref, sum_ref, sq_ref):
    # x_ref  : (Bt, N, T*Cin)      lane-dense input slab
    # ak_ref : (Bt*N, Bt*N)        kron(I_Bt, A_hat)  (batched node mixing)
    # w1_ref : (T*Cin, 3*seg1)     block-Toeplitz conv1|conv2|conv3, temporal block 1
    # b1_ref : (1, 3*seg1)
    # th_ref : (seg1, T1*S)        block-diagonal Theta1 (zero-padded rows)
    # w2_ref : (T1*S, 3*seg2)      block-Toeplitz conv1|conv2|conv3, temporal block 2
    # b2_ref : (1, 3*seg2)
    # o_ref  : (Bt, N, T2*Cout)    lane-dense output slab
    # sum_ref, sq_ref : (Bt, N, 1) per-(batch, node) BN partial sums
    Bt, N, TC = x_ref.shape
    seg1 = w1_ref.shape[1] // 3
    seg2 = w2_ref.shape[1] // 3
    M = o_ref.shape[2]
    rows = Bt * N

    def gate(pre, seg):
        # Segments are 128-lane aligned -> free tile selections.
        c1 = pre[:, :seg]
        c2 = pre[:, seg:2 * seg]
        c3 = pre[:, 2 * seg:]
        return jnp.maximum(c1 * jax.nn.sigmoid(c2) + c3, 0.0)

    x2d = x_ref[...].reshape(rows, TC)                      # free sublane merge

    # --- temporal block 1: single Toeplitz matmul (all taps + all 3 convs) -------
    pre1 = jnp.dot(x2d, w1_ref[...], preferred_element_type=jnp.float32) + b1_ref[...]
    t1 = gate(pre1, seg1)                                   # (rows, seg1)

    # --- spatial step, re-associated as  A_hat @ (t1 @ Theta1) --------------------
    proj = jnp.dot(t1, th_ref[...], preferred_element_type=jnp.float32)   # (rows, T1*S)
    t2 = jnp.maximum(
        jnp.dot(ak_ref[...], proj, preferred_element_type=jnp.float32), 0.0)

    # --- temporal block 2: single Toeplitz matmul ---------------------------------
    pre2 = jnp.dot(t2, w2_ref[...], preferred_element_type=jnp.float32) + b2_ref[...]
    t3 = gate(pre2, seg2)[:, :M]                            # (rows, T2*Cout)

    o_ref[...] = t3.reshape(Bt, N, M)
    # Per-(batch, node) BatchNorm partial sums (reduced across batches in XLA).
    sum_ref[...] = jnp.sum(t3, axis=-1, keepdims=True).reshape(Bt, N, 1)
    sq_ref[...] = jnp.sum(t3 * t3, axis=-1, keepdims=True).reshape(Bt, N, 1)


# ---------------------------------------------------------------------------
# Kernel 2: purely elementwise BatchNorm application, tiled over (batch, node).
# ---------------------------------------------------------------------------
def _bn_apply_kernel(x_ref, scale_ref, shift_ref, o_ref):
    scale = scale_ref[...][None, :, :]                      # (1, tn, 1)
    shift = shift_ref[...][None, :, :]
    o_ref[...] = x_ref[...] * scale + shift


# ---------------------------------------------------------------------------
# Parameter init (mirrors PyTorch Conv2d / Theta1 init shapes & scales).
# Only conv1/conv2/conv3 of each B_TCN feed the forward; the *b convs are unused
# by the PyTorch forward and therefore not materialized.
# ---------------------------------------------------------------------------
def init_params(key, in_channels, spatial_channels, out_channels, node, kernel_size=3):
    k_t1, k_th, k_t2 = jax.random.split(key, 3)

    def conv_init(k, cin, cout):
        kw, kb = jax.random.split(k)
        bound = 1.0 / math.sqrt(cin * kernel_size)
        # PyTorch weight (cout, cin, 1, K) stored here as (K, cin, cout)
        w = jax.random.uniform(kw, (kernel_size, cin, cout), jnp.float32, -bound, bound)
        b = jax.random.uniform(kb, (cout,), jnp.float32, -bound, bound)
        return w, b

    def block_init(k, cin, cout):
        ws, bs = zip(*(conv_init(kk, cin, cout) for kk in jax.random.split(k, 3)))
        return jnp.stack(ws), jnp.stack(bs)                 # (3,K,cin,cout), (3,cout)

    params = {}
    params["t1_w"], params["t1_b"] = block_init(k_t1, in_channels, out_channels)
    stdv = 1.0 / math.sqrt(spatial_channels)
    params["theta1"] = jax.random.uniform(
        k_th, (out_channels, spatial_channels), jnp.float32, -stdv, stdv)
    params["t2_w"], params["t2_b"] = block_init(k_t2, spatial_channels, out_channels)
    params["bn_gamma"] = jnp.ones((node, 1), jnp.float32)
    params["bn_beta"] = jnp.zeros((node, 1), jnp.float32)
    return params


# ---------------------------------------------------------------------------
# Forward pass.
# ---------------------------------------------------------------------------
def tcn_forward(params, X, A_hat):
    """X: (B, N, T, Cin), A_hat: (N, N) -> (B, N, T - 2*(K-1), Cout)."""
    B, N, T, Cin = X.shape
    _, K, _, Cout = params["t1_w"].shape
    S = params["theta1"].shape[1]
    T1 = T - (K - 1)
    T2 = T1 - (K - 1)
    M = T2 * Cout
    seg1 = _round_up(T1 * Cout, 128)
    seg2 = _round_up(M, 128)

    # Weight restructuring (tiny XLA ops; hoistable out of the hot loop if desired).
    w1, b1 = _pack_roles(params["t1_w"], params["t1_b"], T, seg1)
    w2, b2 = _pack_roles(params["t2_w"], params["t2_b"], T1, seg2)
    theta_bd = jnp.kron(jnp.eye(T1, dtype=jnp.float32), params["theta1"])
    theta_bd = jnp.pad(theta_bd, ((0, seg1 - T1 * Cout), (0, 0)))      # (seg1, T1*S)

    Bt = _pick_batch_tile(B)
    # kron(I_Bt, A_hat) mixes nodes for all Bt batches in one matmul (cheap at small N;
    # at production N switch to a per-batch static loop over (N,N)@(N,T1*S) matmuls).
    A_kron = jnp.kron(jnp.eye(Bt, dtype=A_hat.dtype), A_hat)           # (Bt*N, Bt*N)
    X_lane = X.reshape(B, N, T * Cin)                                  # lane-dense input

    t3_flat, ssum, ssq = pl.pallas_call(
        _tcn_fused_kernel,
        out_shape=(jax.ShapeDtypeStruct((B, N, M), jnp.float32),
                   jax.ShapeDtypeStruct((B, N, 1), jnp.float32),
                   jax.ShapeDtypeStruct((B, N, 1), jnp.float32)),
        grid=(B // Bt,),
        in_specs=[
            pl.BlockSpec((Bt, N, T * Cin), lambda b: (b, 0, 0)),
            pl.BlockSpec((Bt * N, Bt * N), lambda b: (0, 0)),
            pl.BlockSpec((T * Cin, 3 * seg1), lambda b: (0, 0)),
            pl.BlockSpec((1, 3 * seg1), lambda b: (0, 0)),
            pl.BlockSpec((seg1, T1 * S), lambda b: (0, 0)),
            pl.BlockSpec((T1 * S, 3 * seg2), lambda b: (0, 0)),
            pl.BlockSpec((1, 3 * seg2), lambda b: (0, 0)),
        ],
        out_specs=(
            pl.BlockSpec((Bt, N, M), lambda b: (b, 0, 0)),
            pl.BlockSpec((Bt, N, 1), lambda b: (b, 0, 0)),
            pl.BlockSpec((Bt, N, 1), lambda b: (b, 0, 0)),
        ),
        compiler_params=pltpu.CompilerParams(dimension_semantics=("parallel",)),
    )(X_lane, A_kron, w1, b1, theta_bd, w2, b2)

    # BatchNorm2d(node) training-mode statistics: reduce the per-(batch, node) partial
    # sums in XLA (N scalars), then fold gamma/beta into a per-node scale/shift.
    # TODO(synk): running_mean/running_var buffers of BatchNorm2d are not tracked; only
    # the training-mode normalization itself is reproduced (eval mode would differ).
    cnt = float(B * M)
    mean = jnp.sum(ssum[:, :, 0], axis=0) / cnt                        # (N,)
    var = jnp.maximum(jnp.sum(ssq[:, :, 0], axis=0) / cnt - mean * mean, 0.0)
    inv = jax.lax.rsqrt(var + 1e-5)
    g = params["bn_gamma"][:, 0]
    scale = (g * inv)[:, None]                                         # (N, 1)
    shift = (params["bn_beta"][:, 0] - mean * g * inv)[:, None]        # (N, 1)

    bt2 = _pick_batch_tile(B)
    tn = _pick_node_tile(N)
    y = pl.pallas_call(
        _bn_apply_kernel,
        out_shape=jax.ShapeDtypeStruct((B, N, M), jnp.float32),
        grid=(B // bt2, N // tn),
        in_specs=[
            pl.BlockSpec((bt2, tn, M), lambda b, n: (b, n, 0)),
            pl.BlockSpec((tn, 1), lambda b, n: (n, 0)),
            pl.BlockSpec((tn, 1), lambda b, n: (n, 0)),
        ],
        out_specs=pl.BlockSpec((bt2, tn, M), lambda b, n: (b, n, 0)),
        compiler_params=pltpu.CompilerParams(
            dimension_semantics=("parallel", "parallel")),
    )(t3_flat, scale, shift)

    return y.reshape(B, N, T2, Cout)      # free contiguous reshape, no transpose


# ---------------------------------------------------------------------------
# Pure-XLA reference (mirrors the PyTorch forward) for correctness checking.
# ---------------------------------------------------------------------------
def _reference_forward(params, X, A_hat):
    hp = jax.lax.Precision.HIGHEST

    def gated_tcn(x, w_roles, b_roles):
        # x: (B, N, Tin, C); w_roles: (3, K, C, Cout); b_roles: (3, Cout)
        K = w_roles.shape[1]
        t_out = x.shape[2] - K + 1
        pre = []
        for r in range(3):
            acc = jnp.zeros(x.shape[:2] + (t_out, w_roles.shape[3]), jnp.float32)
            for k in range(K):
                acc = acc + jnp.einsum('bntc,cd->bntd', x[:, :, k:k + t_out, :],
                                       w_roles[r, k], precision=hp)
            pre.append(acc + b_roles[r])
        return jnp.maximum(pre[0] * jax.nn.sigmoid(pre[1]) + pre[2], 0.0)

    t = gated_tcn(X, params["t1_w"], params["t1_b"])
    lfs = jnp.einsum('ij,bjtc->bitc', A_hat, t, precision=hp)
    t2 = jnp.maximum(jnp.einsum('bitc,cs->bits', lfs, params["theta1"], precision=hp),
                     0.0)
    t3 = gated_tcn(t2, params["t2_w"], params["t2_b"])
    mean = jnp.mean(t3, axis=(0, 2, 3), keepdims=True)
    var = jnp.mean((t3 - mean) ** 2, axis=(0, 2, 3), keepdims=True)
    n = t3.shape[1]
    g = params["bn_gamma"].reshape(1, n, 1, 1)
    b = params["bn_beta"].reshape(1, n, 1, 1)
    return (t3 - mean) * jax.lax.rsqrt(var + 1e-5) * g + b


if __name__ == "__main__":
    B, N, T = 2, 8, 16
    in_channels, spatial_channels, out_channels = 4, 16, 32

    key = jax.random.PRNGKey(0)
    k_x, k_a, k_p = jax.random.split(key, 3)

    X = jax.random.normal(k_x, (B, N, T, in_channels), jnp.float32)
    A = jax.random.uniform(k_a, (N, N), jnp.float32)
    A_hat = A / jnp.sum(A, axis=1, keepdims=True)          # row-normalized adjacency

    params = init_params(k_p, in_channels, spatial_channels, out_channels, node=N)

    out = jax.jit(tcn_forward)(params, X, A_hat)
    out = jax.block_until_ready(out)
    assert out.shape == (B, N, T - 4, out_channels), out.shape
    assert bool(jnp.all(jnp.isfinite(out)))

    ref = jax.jit(_reference_forward)(params, X, A_hat)
    err = float(jnp.max(jnp.abs(out - ref)))
    assert err < 3e-2, f"mismatch vs pure-JAX reference: max abs err = {err}"

    print("KERNEL_OK")
</pallas_src>

<mosaic_0001>
module attributes {stable_mosaic.version = 11 : i64} {
  func.func @_tcn_fused_kernel(%arg0: i32, %arg1: memref<1x8x64xf32, #tpu.memory_space<vmem>>, %arg2: memref<8x8xf32, #tpu.memory_space<vmem>>, %arg3: memref<64x1536xf32, #tpu.memory_space<vmem>>, %arg4: memref<1x1536xf32, #tpu.memory_space<vmem>>, %arg5: memref<512x224xf32, #tpu.memory_space<vmem>>, %arg6: memref<224x1152xf32, #tpu.memory_space<vmem>>, %arg7: memref<1x1152xf32, #tpu.memory_space<vmem>>, %arg8: memref<1x8x384xf32, #tpu.memory_space<vmem>>, %arg9: memref<1x8x1xf32, #tpu.memory_space<vmem>>, %arg10: memref<1x8x1xf32, #tpu.memory_space<vmem>>) attributes {dimension_semantics = [#tpu.dimension_semantics<parallel>], iteration_bounds = array<i64: 2>, scalar_prefetch = 0 : i64, scratch_operands = 0 : i64, tpu.core_type = #tpu.core_type<tc>, window_params = [{transform_indices = @transform_0, window_bounds = array<i64: 1, 8, 64>}, {pipeline_mode = #tpu.pipeline_mode<synchronous>, transform_indices = @transform_1, window_bounds = array<i64: 8, 8>}, {pipeline_mode = #tpu.pipeline_mode<synchronous>, transform_indices = @transform_2, window_bounds = array<i64: 64, 1536>}, {pipeline_mode = #tpu.pipeline_mode<synchronous>, transform_indices = @transform_3, window_bounds = array<i64: 1, 1536>}, {pipeline_mode = #tpu.pipeline_mode<synchronous>, transform_indices = @transform_4, window_bounds = array<i64: 512, 224>}, {pipeline_mode = #tpu.pipeline_mode<synchronous>, transform_indices = @transform_5, window_bounds = array<i64: 224, 1152>}, {pipeline_mode = #tpu.pipeline_mode<synchronous>, transform_indices = @transform_6, window_bounds = array<i64: 1, 1152>}, {transform_indices = @transform_7, window_bounds = array<i64: 1, 8, 384>}, {transform_indices = @transform_8, window_bounds = array<i64: 1, 8, 1>}, {transform_indices = @transform_9, window_bounds = array<i64: 1, 8, 1>}]} {
    %c0 = arith.constant 0 : index
    %c0_0 = arith.constant 0 : index
    %c0_1 = arith.constant 0 : index
    %0 = vector.load %arg1[%c0, %c0_0, %c0_1] : memref<1x8x64xf32, #tpu.memory_space<vmem>>, vector<1x8x64xf32>
    %1 = vector.shape_cast %0 : vector<1x8x64xf32> to vector<8x64xf32>
    %c0_2 = arith.constant 0 : index
    %c0_3 = arith.constant 0 : index
    %2 = vector.load %arg3[%c0_2, %c0_3] : memref<64x1536xf32, #tpu.memory_space<vmem>>, vector<64x1536xf32>
    %cst = arith.constant dense<0.000000e+00> : vector<8x1536xf32>
    %3 = tpu.matmul %1, %2, %cst {dimension_numbers = #tpu.dot_dimension_numbers<[1], [0], [0], [1], [0, 0, 1, 1], [], []>} : vector<8x64xf32>, vector<64x1536xf32>, vector<8x1536xf32> -> vector<8x1536xf32>
    %c0_4 = arith.constant 0 : index
    %c0_5 = arith.constant 0 : index
    %4 = vector.load %arg4[%c0_4, %c0_5] : memref<1x1536xf32, #tpu.memory_space<vmem>>, vector<1x1536xf32>
    %5 = vector.broadcast %4 : vector<1x1536xf32> to vector<8x1536xf32>
    %6 = arith.addf %3, %5 : vector<8x1536xf32>
    %7 = vector.extract_strided_slice %6 {offsets = [0, 0], sizes = [8, 512], strides = [1, 1]} : vector<8x1536xf32> to vector<8x512xf32>
    %8 = vector.extract_strided_slice %6 {offsets = [0, 512], sizes = [8, 512], strides = [1, 1]} : vector<8x1536xf32> to vector<8x512xf32>
    %9 = vector.extract_strided_slice %6 {offsets = [0, 1024], sizes = [8, 512], strides = [1, 1]} : vector<8x1536xf32> to vector<8x512xf32>
    %10 = arith.negf %8 : vector<8x512xf32>
    %11 = math.exp %10 : vector<8x512xf32>
    %cst_6 = arith.constant 1.000000e+00 : f32
    %12 = vector.broadcast %cst_6 : f32 to vector<8x512xf32>
    %13 = arith.addf %12, %11 : vector<8x512xf32>
    %14 = arith.divf %12, %13 : vector<8x512xf32>
    %15 = arith.mulf %7, %14 : vector<8x512xf32>
    %16 = arith.addf %15, %9 : vector<8x512xf32>
    %cst_7 = arith.constant 0.000000e+00 : f32
    %17 = vector.broadcast %cst_7 : f32 to vector<8x512xf32>
    %18 = arith.maximumf %16, %17 : vector<8x512xf32>
    %c0_8 = arith.constant 0 : index
    %c0_9 = arith.constant 0 : index
    %19 = vector.load %arg5[%c0_8, %c0_9] : memref<512x224xf32, #tpu.memory_space<vmem>>, vector<512x224xf32>
    %cst_10 = arith.constant dense<0.000000e+00> : vector<8x224xf32>
    %20 = tpu.matmul %18, %19, %cst_10 {dimension_numbers = #tpu.dot_dimension_numbers<[1], [0], [0], [1], [0, 0, 1, 1], [], []>} : vector<8x512xf32>, vector<512x224xf32>, vector<8x224xf32> -> vector<8x224xf32>
    %c0_11 = arith.constant 0 : index
    %c0_12 = arith.constant 0 : index
    %21 = vector.load %arg2[%c0_11, %c0_12] : memref<8x8xf32, #tpu.memory_space<vmem>>, vector<8x8xf32>
    %cst_13 = arith.constant dense<0.000000e+00> : vector<8x224xf32>
    %22 = tpu.matmul %21, %20, %cst_13 {dimension_numbers = #tpu.dot_dimension_numbers<[1], [0], [0], [1], [0, 0, 1, 1], [], []>} : vector<8x8xf32>, vector<8x224xf32>, vector<8x224xf32> -> vector<8x224xf32>
    %cst_14 = arith.constant 0.000000e+00 : f32
    %23 = vector.broadcast %cst_14 : f32 to vector<8x224xf32>
    %24 = arith.maximumf %22, %23 : vector<8x224xf32>
    %c0_15 = arith.constant 0 : index
    %c0_16 = arith.constant 0 : index
    %25 = vector.load %arg6[%c0_15, %c0_16] : memref<224x1152xf32, #tpu.memory_space<vmem>>, vector<224x1152xf32>
    %cst_17 = arith.constant dense<0.000000e+00> : vector<8x1152xf32>
    %26 = tpu.matmul %24, %25, %cst_17 {dimension_numbers = #tpu.dot_dimension_numbers<[1], [0], [0], [1], [0, 0, 1, 1], [], []>} : vector<8x224xf32>, vector<224x1152xf32>, vector<8x1152xf32> -> vector<8x1152xf32>
    %c0_18 = arith.constant 0 : index
    %c0_19 = arith.constant 0 : index
    %27 = vector.load %arg7[%c0_18, %c0_19] : memref<1x1152xf32, #tpu.memory_space<vmem>>, vector<1x1152xf32>
    %28 = vector.broadcast %27 : vector<1x1152xf32> to vector<8x1152xf32>
    %29 = arith.addf %26, %28 : vector<8x1152xf32>
    %30 = vector.extract_strided_slice %29 {offsets = [0, 0], sizes = [8, 384], strides = [1, 1]} : vector<8x1152xf32> to vector<8x384xf32>
    %31 = vector.extract_strided_slice %29 {offsets = [0, 384], sizes = [8, 384], strides = [1, 1]} : vector<8x1152xf32> to vector<8x384xf32>
    %32 = vector.extract_strided_slice %29 {offsets = [0, 768], sizes = [8, 384], strides = [1, 1]} : vector<8x1152xf32> to vector<8x384xf32>
    %33 = arith.negf %31 : vector<8x384xf32>
    %34 = math.exp %33 : vector<8x384xf32>
    %cst_20 = arith.constant 1.000000e+00 : f32
    %35 = vector.broadcast %cst_20 : f32 to vector<8x384xf32>
    %36 = arith.addf %35, %34 : vector<8x384xf32>
    %37 = arith.divf %35, %36 : vector<8x384xf32>
    %38 = arith.mulf %30, %37 : vector<8x384xf32>
    %39 = arith.addf %38, %32 : vector<8x384xf32>
    %cst_21 = arith.constant 0.000000e+00 : f32
    %40 = vector.broadcast %cst_21 : f32 to vector<8x384xf32>
    %41 = arith.maximumf %39, %40 : vector<8x384xf32>
    %42 = vector.shape_cast %41 : vector<8x384xf32> to vector<1x8x384xf32>
    %c0_22 = arith.constant 0 : index
    %c0_23 = arith.constant 0 : index
    %c0_24 = arith.constant 0 : index
    %43 = vector.load %arg8[%c0_22, %c0_23, %c0_24] : memref<1x8x384xf32, #tpu.memory_space<vmem>>, vector<1x8x384xf32>
    tpu.vector_store %arg8[%c0_22, %c0_23, %c0_24], %42 {strides = array<i32>} : memref<1x8x384xf32, #tpu.memory_space<vmem>>, vector<1x8x384xf32>,
    %cst_25 = arith.constant dense<0.000000e+00> : vector<8xf32>
    %44 = vector.multi_reduction <add>, %41, %cst_25 [1] : vector<8x384xf32> to vector<8xf32>
    %45 = vector.shape_cast %44 : vector<8xf32> to vector<8x1xf32>
    %46 = vector.shape_cast %45 : vector<8x1xf32> to vector<1x8x1xf32>
    %c0_26 = arith.constant 0 : index
    %c0_27 = arith.constant 0 : index
    %c0_28 = arith.constant 0 : index
    %47 = vector.load %arg9[%c0_26, %c0_27, %c0_28] : memref<1x8x1xf32, #tpu.memory_space<vmem>>, vector<1x8x1xf32>
    tpu.vector_store %arg9[%c0_26, %c0_27, %c0_28], %46 {strides = array<i32>} : memref<1x8x1xf32, #tpu.memory_space<vmem>>, vector<1x8x1xf32>,
    %48 = arith.mulf %41, %41 : vector<8x384xf32>
    %cst_29 = arith.constant dense<0.000000e+00> : vector<8xf32>
    %49 = vector.multi_reduction <add>, %48, %cst_29 [1] : vector<8x384xf32> to vector<8xf32>
    %50 = vector.shape_cast %49 : vector<8xf32> to vector<8x1xf32>
    %51 = vector.shape_cast %50 : vector<8x1xf32> to vector<1x8x1xf32>
    %c0_30 = arith.constant 0 : index
    %c0_31 = arith.constant 0 : index
    %c0_32 = arith.constant 0 : index
    %52 = vector.load %arg10[%c0_30, %c0_31, %c0_32] : memref<1x8x1xf32, #tpu.memory_space<vmem>>, vector<1x8x1xf32>
    tpu.vector_store %arg10[%c0_30, %c0_31, %c0_32], %51 {strides = array<i32>} : memref<1x8x1xf32, #tpu.memory_space<vmem>>, vector<1x8x1xf32>,
    return
  }
  func.func @transform_0(%arg0: i32) -> (i32, i32, i32) {
    %c0_i32 = arith.constant 0 : i32
    %c0_i32_0 = arith.constant 0 : i32
    %c0_i32_1 = arith.constant 0 : i32
    return %arg0, %c0_i32, %c0_i32_0 : i32, i32, i32
  }
  func.func @transform_1(%arg0: i32) -> (i32, i32) {
    %c0_i32 = arith.constant 0 : i32
    %c0_i32_0 = arith.constant 0 : i32
    %c0_i32_1 = arith.constant 0 : i32
    return %c0_i32, %c0_i32_0 : i32, i32
  }
  func.func @transform_2(%arg0: i32) -> (i32, i32) {
    %c0_i32 = arith.constant 0 : i32
    %c0_i32_0 = arith.constant 0 : i32
    %c0_i32_1 = arith.constant 0 : i32
    return %c0_i32, %c0_i32_0 : i32, i32
  }
  func.func @transform_3(%arg0: i32) -> (i32, i32) {
    %c0_i32 = arith.constant 0 : i32
    %c0_i32_0 = arith.constant 0 : i32
    %c0_i32_1 = arith.constant 0 : i32
    return %c0_i32, %c0_i32_0 : i32, i32
  }
  func.func @transform_4(%arg0: i32) -> (i32, i32) {
    %c0_i32 = arith.constant 0 : i32
    %c0_i32_0 = arith.constant 0 : i32
    %c0_i32_1 = arith.constant 0 : i32
    return %c0_i32, %c0_i32_0 : i32, i32
  }
  func.func @transform_5(%arg0: i32) -> (i32, i32) {
    %c0_i32 = arith.constant 0 : i32
    %c0_i32_0 = arith.constant 0 : i32
    %c0_i32_1 = arith.constant 0 : i32
    return %c0_i32, %c0_i32_0 : i32, i32
  }
  func.func @transform_6(%arg0: i32) -> (i32, i32) {
    %c0_i32 = arith.constant 0 : i32
    %c0_i32_0 = arith.constant 0 : i32
    %c0_i32_1 = arith.constant 0 : i32
    return %c0_i32, %c0_i32_0 : i32, i32
  }
  func.func @transform_7(%arg0: i32) -> (i32, i32, i32) {
    %c0_i32 = arith.constant 0 : i32
    %c0_i32_0 = arith.constant 0 : i32
    %c0_i32_1 = arith.constant 0 : i32
    return %arg0, %c0_i32, %c0_i32_0 : i32, i32, i32
  }
  func.func @transform_8(%arg0: i32) -> (i32, i32, i32) {
    %c0_i32 = arith.constant 0 : i32
    %c0_i32_0 = arith.constant 0 : i32
    %c0_i32_1 = arith.constant 0 : i32
    return %arg0, %c0_i32, %c0_i32_0 : i32, i32, i32
  }
  func.func @transform_9(%arg0: i32) -> (i32, i32, i32) {
    %c0_i32 = arith.constant 0 : i32
    %c0_i32_0 = arith.constant 0 : i32
    %c0_i32_1 = arith.constant 0 : i32
    return %arg0, %c0_i32, %c0_i32_0 : i32, i32, i32
  }
}

module attributes {stable_mosaic.version = 11 : i64} {
  func.func @_bn_apply_kernel(%arg0: i32, %arg1: i32, %arg2: memref<1x8x384xf32, #tpu.memory_space<vmem>>, %arg3: memref<8x1xf32, #tpu.memory_space<vmem>>, %arg4: memref<8x1xf32, #tpu.memory_space<vmem>>, %arg5: memref<1x8x384xf32, #tpu.memory_space<vmem>>) attributes {dimension_semantics = [#tpu.dimension_semantics<parallel>, #tpu.dimension_semantics<parallel>], iteration_bounds = array<i64: 2, 1>, scalar_prefetch = 0 : i64, scratch_operands = 0 : i64, tpu.core_type = #tpu.core_type<tc>, window_params = [{transform_indices = @transform_0, window_bounds = array<i64: 1, 8, 384>}, {transform_indices = @transform_1, window_bounds = array<i64: 8, 1>}, {transform_indices = @transform_2, window_bounds = array<i64: 8, 1>}, {transform_indices = @transform_3, window_bounds = array<i64: 1, 8, 384>}]} {
    %c0 = arith.constant 0 : index
    %c0_0 = arith.constant 0 : index
    %0 = vector.load %arg3[%c0, %c0_0] : memref<8x1xf32, #tpu.memory_space<vmem>>, vector<8x1xf32>
    %1 = vector.shape_cast %0 : vector<8x1xf32> to vector<1x8x1xf32>
    %c0_1 = arith.constant 0 : index
    %c0_2 = arith.constant 0 : index
    %2 = vector.load %arg4[%c0_1, %c0_2] : memref<8x1xf32, #tpu.memory_space<vmem>>, vector<8x1xf32>
    %3 = vector.shape_cast %2 : vector<8x1xf32> to vector<1x8x1xf32>
    %c0_3 = arith.constant 0 : index
    %c0_4 = arith.constant 0 : index
    %c0_5 = arith.constant 0 : index
    %4 = vector.load %arg2[%c0_3, %c0_4, %c0_5] : memref<1x8x384xf32, #tpu.memory_space<vmem>>, vector<1x8x384xf32>
    %5 = vector.broadcast %1 : vector<1x8x1xf32> to vector<1x8x384xf32>
    %6 = arith.mulf %4, %5 : vector<1x8x384xf32>
    %7 = vector.broadcast %3 : vector<1x8x1xf32> to vector<1x8x384xf32>
    %8 = arith.addf %6, %7 : vector<1x8x384xf32>
    %c0_6 = arith.constant 0 : index
    %c0_7 = arith.constant 0 : index
    %c0_8 = arith.constant 0 : index
    %9 = vector.load %arg5[%c0_6, %c0_7, %c0_8] : memref<1x8x384xf32, #tpu.memory_space<vmem>>, vector<1x8x384xf32>
    tpu.vector_store %arg5[%c0_6, %c0_7, %c0_8], %8 {strides = array<i32>} : memref<1x8x384xf32, #tpu.memory_space<vmem>>, vector<1x8x384xf32>,
    return
  }
  func.func @transform_0(%arg0: i32, %arg1: i32) -> (i32, i32, i32) {
    %c0_i32 = arith.constant 0 : i32
    %c0_i32_0 = arith.constant 0 : i32
    return %arg0, %arg1, %c0_i32 : i32, i32, i32
  }
  func.func @transform_1(%arg0: i32, %arg1: i32) -> (i32, i32) {
    %c0_i32 = arith.constant 0 : i32
    %c0_i32_0 = arith.constant 0 : i32
    return %arg1, %c0_i32 : i32, i32
  }
  func.func @transform_2(%arg0: i32, %arg1: i32) -> (i32, i32) {
    %c0_i32 = arith.constant 0 : i32
    %c0_i32_0 = arith.constant 0 : i32
    return %arg1, %c0_i32 : i32, i32
  }
  func.func @transform_3(%arg0: i32, %arg1: i32) -> (i32, i32, i32) {
    %c0_i32 = arith.constant 0 : i32
    %c0_i32_0 = arith.constant 0 : i32
    return %arg0, %arg1, %c0_i32 : i32, i32, i32
  }
}

</mosaic_0001>

<llo_original>
// kernel: tile.26
$region0: #{tile.26}
  #allocation0 [shape = 's32[1]{0}', space=sflag, size = 0x4, scoped, tag = 'scoped memory for tile.26']
  %s0 = inlined_call_operand.vmem [shape: f32[32], index: 0, kind: input, shape index: {}]
  %s1 = inlined_call_operand.vmem [shape: f32[14,32], index: 1, kind: output, shape index: {}]
  // Predicated region
  $region2: #{tile.26} parent=0 // pred_check
    _
  $region3: #{tile.26} parent=0 // pred_check_branch
    %3 = sbr.rel (0) target = $region5
  $region4: #{tile.26} parent=0 // pred_region
    _
  $region5: #{tile.26} parent=0 // pred_fallthru
    _
  %v4 = vld [vmem:[%s0] ss:$0 sm:$0xff]
  %5 = vst [vmem:[%s1] sm:$0xff] %v4
  %s6 = scalar_lea.vmem %s1, 8
  %7 = vst [vmem:[%s6] sm:$0xff] %v4

// kernel: tile.27
$region0: #{tile.27}
  %s0 = inlined_call_operand.vmem [shape: f32[14,32], index: 0, kind: input, shape index: {}]
  %s1 = inlined_call_operand.vmem [shape: f32[448], index: 1, kind: output, shape index: {}]
  $region1: #{tile.27} parent=0
    #allocation0 [shape = 'u8[4096]{0}', space=vmem, size = 0x1000, scoped, tag = 'scoped mem for output reshape']
    %v2 = vld [vmem:[%s0] ss:$4 sm:$0xf]
    %vm3 = vcmask 261120
    %4 = vst.msk [vmem:[#allocation0] sm:$0xf] %vm3, %v2
    %s5 = scalar_lea.vmem %s0, 3
    %v6 = vld [vmem:[%s5] ss:$4 sm:$0x7]
    %7 = vrot.lane.b32.xlu0 %v6, 96
    %v8 = vpop.permute.xlu0 %7
    %vm9 = vcmask 1048320
    %10 = vst.msk [vmem:[#allocation0] sm:$0x7] %vm9, %v8
    %s11 = scalar_lea.vmem %s0, 2
    %v12 = vld [vmem:[%s11] ss:$4 sm:$0x7]
    %13 = vrot.lane.b32.xlu0 %v12, 64
    %v14 = vpop.permute.xlu0 %13
    %vm15 = vcmask 785920
    %16 = vst.msk [vmem:[#allocation0] sm:$0x7] %vm15, %v14
    %s17 = scalar_lea.vmem %s0, 1
    %v18 = vld [vmem:[%s17] ss:$4 sm:$0xf]
    %19 = vrot.lane.b32.xlu0 %v18, 32
    %v20 = vpop.permute.xlu0 %19
    %vm21 = vcmask 523520
    %22 = vst.msk [vmem:[#allocation0] sm:$0xf] %vm21, %v20
    %s24 = ssub.s32 16, 1
    %v25 = vld [vmem:[#allocation0] sm:%s24]
    %s27 = ssub.s32 16, 1
    %28 = vst [vmem:[%s1] sm:%s27] %v25

// kernel: tile.38
$region0: #{tile.38}
  #allocation0 [shape = 's32[1]{0}', space=sflag, size = 0x4, scoped, tag = 'scoped memory for tile.38']
  %s0 = inlined_call_operand.vmem [shape: f32[32], index: 0, kind: input, shape index: {}]
  %s1 = inlined_call_operand.vmem [shape: f32[12,32], index: 1, kind: output, shape index: {}]
  // Predicated region
  $region2: #{tile.38} parent=0 // pred_check
    _
  $region3: #{tile.38} parent=0 // pred_check_branch
    %3 = sbr.rel (0) target = $region5
  $region4: #{tile.38} parent=0 // pred_region
    _
  $region5: #{tile.38} parent=0 // pred_fallthru
    _
  %v4 = vld [vmem:[%s0] ss:$0 sm:$0xff]
  %5 = vst [vmem:[%s1] sm:$0xff] %v4
  %s6 = scalar_lea.vmem %s1, 8
  %7 = vst [vmem:[%s6] sm:$0xff] %v4

// kernel: tile.39
$region0: #{tile.39}
  %s0 = inlined_call_operand.vmem [shape: f32[12,32], index: 0, kind: input, shape index: {}]
  %s1 = inlined_call_operand.vmem [shape: f32[384], index: 1, kind: output, shape index: {}]
  $region1: #{tile.39} parent=0
    #allocation0 [shape = 'u8[4096]{0}', space=vmem, size = 0x1000, scoped, tag = 'scoped mem for output reshape']
    %v2 = vld [vmem:[%s0] ss:$4 sm:$0x7]
    %vm3 = vcmask 261120
    %4 = vst.msk [vmem:[#allocation0] sm:$0x7] %vm3, %v2
    %s5 = scalar_lea.vmem %s0, 3
    %v6 = vld [vmem:[%s5] ss:$4 sm:$0x7]
    %7 = vrot.lane.b32.xlu0 %v6, 96
    %v8 = vpop.permute.xlu0 %7
    %vm9 = vcmask 1048320
    %10 = vst.msk [vmem:[#allocation0] sm:$0x7] %vm9, %v8
    %s11 = scalar_lea.vmem %s0, 2
    %v12 = vld [vmem:[%s11] ss:$4 sm:$0x7]
    %13 = vrot.lane.b32.xlu0 %v12, 64
    %v14 = vpop.permute.xlu0 %13
    %vm15 = vcmask 785920
    %16 = vst.msk [vmem:[#allocation0] sm:$0x7] %vm15, %v14
    %s17 = scalar_lea.vmem %s0, 1
    %v18 = vld [vmem:[%s17] ss:$4 sm:$0x7]
    %19 = vrot.lane.b32.xlu0 %v18, 32
    %v20 = vpop.permute.xlu0 %19
    %vm21 = vcmask 523520
    %22 = vst.msk [vmem:[#allocation0] sm:$0x7] %vm21, %v20
    %s24 = ssub.s32 16, 1
    %v25 = vld [vmem:[#allocation0] sm:%s24]
    %s27 = ssub.s32 16, 1
    %28 = vst [vmem:[%s1] sm:%s27] %v25

// kernel: tcn_forward.3
$region0: #{tcn_forward.3}
  #allocation0 [shape = 'u32[]', space=smem, size = 0x4, offset = 0x4, fixed_abs, tag = 'smem constant byte address 0x4 - core index']
  #allocation1 [shape = 'u32[72,128]{1,0:T(1,128)}', space=vmem, size = 0x9000, scoped, tag = 'internal scratch']
  %s0 = inlined_call_operand.vmem [shape: f32[2,8,384], index: 0, kind: input, shape index: {}]
  %s1 = inlined_call_operand.vmem [shape: f32[8,1], index: 1, kind: input, shape index: {}]
  %s2 = inlined_call_operand.vmem [shape: f32[8,1], index: 2, kind: input, shape index: {}]
  %s3 = inlined_call_operand.vmem [shape: f32[2,8,384], index: 3, kind: output, shape index: {}]
  %s4 = sld [smem:[#allocation0]]
  $region45: #{tcn_forward.3} parent=0
    _
  %s6 = ssub.s32 1, %s4
  %s7 = scalar_select 0, %s6, %s4
  loop: start=0, step=1, limit=4
  $region2: #{tcn_forward.3} parent=0 // loop_pre_header
    _
  $region3: #{tcn_forward.3} parent=0 // loop_header
    %s9 = sphi 0, %s13
    %p10 = scmp.ge.s32.totalorder %s9, 4
    %s16 = sphi 0, %s28
    %s17 = sphi 0, %s24
    %s18 = sphi 0, %s16
    %s19 = sphi 0, %s17
    %s20 = sphi 0, %s18
    %s21 = sphi 0, %s19
    %s33 = sphi 0, %s35
    %s36 = sphi 0, %s33
    %s37 = sphi 0, %s36
    %s53 = sphi 0, %s37
    %s59 = sphi 0, %s61
    %s62 = sphi 0, %s59
    %s63 = sphi 0, %s62
    %s79 = sphi 0, %s63
    %s85 = sphi 0, %s87
    %s88 = sphi 0, %s85
    %s89 = sphi 0, %s88
    %s105 = sphi 0, %s89
    %s113 = sphi 0, %s115
    %s116 = sphi 0, %s113
    %s117 = sphi 0, %s116
    %s133 = sphi 0, %s117
  $region4: #{tcn_forward.3} parent=0 // loop_header_branch
    %12 = sbr.rel (%p10) target = $region8
  $region5: #{tcn_forward.3} parent=0 // loop_body
    %s14 = ssub.s32 %s9, 1
    %s15 = ssub.s32 %s9, 2
    %s22 = sadd.s32 1, %s17
    %p23 = scmp.ge.s32.totalorder %s22, 1
    %s24 = scalar_select %p23, 0, %s22
    %s25 = sadd.s32 1, %s16
    %s26 = scalar_select %p23, %s25, %s16
    %p27 = scmp.ge.s32.totalorder %s26, 2
    %s28 = scalar_select %p27, 0, %s26
    %s29 = ssub.s32 %s16, %s28
    %s30 = ssub.s32 %s17, %s24
    %s31 = sor.u32 %s29, %s30
    %p32 = scmp.eq.s32.totalorder %s31, 0
    %s34 = sadd.s32 %s33, 1
    %s35 = scalar_select %p32, %s33, %s34
    %p38 = pneg %p32
    %p39 = scmp.eq.s32.totalorder %s9, 1
    %p40 = por %p38, %p39
    %p41 = scmp.ne.s32.totalorder %s33, %s36
    %p42 = scmp.eq.s32.totalorder %s9, 0
    %p43 = por %p41, %p42
    %p44 = scmp.ne.s32.totalorder %s33, %s36
    %p45 = scmp.eq.s32.totalorder %s14, 1
    %p46 = por %p44, %p45
    %p47 = scmp.ne.s32.totalorder %s36, %s37
    %p48 = scmp.eq.s32.totalorder %s14, 0
    %p49 = por %p47, %p48
    %p50 = scmp.ne.s32.totalorder %s36, %s37
    %p51 = scmp.eq.s32.totalorder %s15, 1
    %p52 = por %p50, %p51
    %p54 = scmp.ne.s32.totalorder %s37, %s53
    %p55 = scmp.eq.s32.totalorder %s15, 0
    %p56 = por %p54, %p55
    %s57 = ssub.s32 %s17, %s24
    %p58 = scmp.eq.s32.totalorder %s57, 0
    %s60 = sadd.s32 %s59, 1
    %s61 = scalar_select %p58, %s59, %s60
    %p64 = pneg %p58
    %p65 = scmp.eq.s32.totalorder %s9, 1
    %p66 = por %p64, %p65
    %p67 = scmp.ne.s32.totalorder %s59, %s62
    %p68 = scmp.eq.s32.totalorder %s9, 0
    %p69 = por %p67, %p68
    %p70 = scmp.ne.s32.totalorder %s59, %s62
    %p71 = scmp.eq.s32.totalorder %s14, 1
    %p72 = por %p70, %p71
    %p73 = scmp.ne.s32.totalorder %s62, %s63
    %p74 = scmp.eq.s32.totalorder %s14, 0
    %p75 = por %p73, %p74
    %p76 = scmp.ne.s32.totalorder %s62, %s63
    %p77 = scmp.eq.s32.totalorder %s15, 1
    %p78 = por %p76, %p77
    %p80 = scmp.ne.s32.totalorder %s63, %s79
    %p81 = scmp.eq.s32.totalorder %s15, 0
    %p82 = por %p80, %p81
    %s83 = ssub.s32 %s17, %s24
    %p84 = scmp.eq.s32.totalorder %s83, 0
    %s86 = sadd.s32 %s85, 1
    %s87 = scalar_select %p84, %s85, %s86
    %p90 = pneg %p84
    %p91 = scmp.eq.s32.totalorder %s9, 1
    %p92 = por %p90, %p91
    %p93 = scmp.ne.s32.totalorder %s85, %s88
    %p94 = scmp.eq.s32.totalorder %s9, 0
    %p95 = por %p93, %p94
    %p96 = scmp.ne.s32.totalorder %s85, %s88
    %p97 = scmp.eq.s32.totalorder %s14, 1
    %p98 = por %p96, %p97
    %p99 = scmp.ne.s32.totalorder %s88, %s89
    %p100 = scmp.eq.s32.totalorder %s14, 0
    %p101 = por %p99, %p100
    %p102 = scmp.ne.s32.totalorder %s88, %s89
    %p103 = scmp.eq.s32.totalorder %s15, 1
    %p104 = por %p102, %p103
    %p106 = scmp.ne.s32.totalorder %s89, %s105
    %p107 = scmp.eq.s32.totalorder %s15, 0
    %p108 = por %p106, %p107
    %s109 = ssub.s32 %s16, %s28
    %s110 = ssub.s32 %s17, %s24
    %s111 = sor.u32 %s109, %s110
    %p112 = scmp.eq.s32.totalorder %s111, 0
    %s114 = sadd.s32 %s113, 1
    %s115 = scalar_select %p112, %s113, %s114
    %p118 = pneg %p112
    %p119 = scmp.eq.s32.totalorder %s9, 1
    %p120 = por %p118, %p119
    %p121 = scmp.ne.s32.totalorder %s113, %s116
    %p122 = scmp.eq.s32.totalorder %s9, 0
    %p123 = por %p121, %p122
    %p124 = scmp.ne.s32.totalorder %s113, %s116
    %p125 = scmp.eq.s32.totalorder %s14, 1
    %p126 = por %p124, %p125
    %p127 = scmp.ne.s32.totalorder %s116, %s117
    %p128 = scmp.eq.s32.totalorder %s14, 0
    %p129 = por %p127, %p128
    %p130 = scmp.ne.s32.totalorder %s116, %s117
    %p131 = scmp.eq.s32.totalorder %s15, 1
    %p132 = por %p130, %p131
    %p134 = scmp.ne.s32.totalorder %s117, %s133
    %p135 = scmp.eq.s32.totalorder %s15, 0
    %p136 = por %p134, %p135
    %p137 = scmp.le.s32.totalorder 1, %s9
    %p138 = scmp.lt.s32.totalorder %s9, 3
    %p139 = pnand %p137, %p138
    %p140 = pneg %p139
    // Predicated region
    $region9: #{tcn_forward.3} parent=5 // pred_check
      _
    $region10: #{tcn_forward.3} parent=5 // pred_check_branch
      %142 = sbr.rel (%p139) target = $region12
    $region11: #{tcn_forward.3} parent=5 // pred_region
      %s143 = ssub.s32 %s9, 1
      // Predicated region
      $region13: #{tcn_forward.3} parent=11 // pred_check
        %p144 = pneg %p75
      $region14: #{tcn_forward.3} parent=11 // pred_check_branch
        %146 = sbr.rel (%p144) target = $region16
      $region15: #{tcn_forward.3} parent=11 // pred_region
        %p147 = scmp.lt.s32.totalorder %s19, 0
        %s148 = scalar_select %p147, %s19, 0
        %s149 = smul.addr %s148, 8
        %s150 = scalar_lea.vmem %s1, %s149
      $region16: #{tcn_forward.3} parent=11 // pred_fallthru
        _
      // Predicated region
      $region17: #{tcn_forward.3} parent=11 // pred_check
        %p151 = pneg %p101
      $region18: #{tcn_forward.3} parent=11 // pred_check_branch
        %153 = sbr.rel (%p151) target = $region20
      $region19: #{tcn_forward.3} parent=11 // pred_region
        %p154 = scmp.lt.s32.totalorder %s19, 0
        %s155 = scalar_select %p154, %s19, 0
        %s156 = smul.addr %s155, 8
        %s157 = scalar_lea.vmem %s2, %s156
      $region20: #{tcn_forward.3} parent=11 // pred_fallthru
        _
    $region12: #{tcn_forward.3} parent=5 // pred_fallthru
      _
    %p158 = scmp.lt.s32.totalorder %s9, 2
    // Predicated region
    $region21: #{tcn_forward.3} parent=5 // pred_check
      %p159 = pneg %p158
    $region22: #{tcn_forward.3} parent=5 // pred_check_branch
      %161 = sbr.rel (%p159) target = $region24
    $region23: #{tcn_forward.3} parent=5 // pred_region
      // Predicated region
      $region25: #{tcn_forward.3} parent=23 // pred_check
        %p162 = pneg %p43
      $region26: #{tcn_forward.3} parent=23 // pred_check_branch
        %164 = sbr.rel (%p162) target = $region28
      $region27: #{tcn_forward.3} parent=23 // pred_region
        %p165 = scmp.lt.s32.totalorder %s16, 1
        %s166 = scalar_select %p165, %s16, 1
        %p167 = scmp.lt.s32.totalorder %s17, 0
        %s168 = scalar_select %p167, %s17, 0
        %s169 = smul.addr %s168, 3
        %s170 = smul.addr %s166, 3
        %s171 = sadd.s32 %s169, %s170
        %s172 = smul.addr %s171, 8
        %s173 = scalar_lea.vmem %s0, %s172
      $region28: #{tcn_forward.3} parent=23 // pred_fallthru
        _
    $region24: #{tcn_forward.3} parent=5 // pred_fallthru
      _
    %p174 = scmp.le.s32.totalorder 1, %s9
    %p175 = scmp.lt.s32.totalorder %s9, 3
    %p176 = pnand %p174, %p175
    %p177 = pneg %p176
    // Predicated region
    $region29: #{tcn_forward.3} parent=5 // pred_check
      _
    $region30: #{tcn_forward.3} parent=5 // pred_check_branch
      %179 = sbr.rel (%p176) target = $region32
    $region31: #{tcn_forward.3} parent=5 // pred_region
      %s180 = ssub.s32 %s9, 1
      %p181 = scmp.lt.s32.totalorder %s18, 1
      %s182 = scalar_select %p181, %s18, 1
      %p183 = scmp.lt.s32.totalorder %s19, 0
      %s184 = scalar_select %p183, %s19, 0
      %s185 = smul.addr %s184, 3
      %s186 = smul.addr %s182, 3
      %s187 = sadd.s32 %s185, %s186
      %s188 = smul.addr %s187, 8
      %s189 = scalar_lea.vmem %s0, %s188
      %p190 = pneg %p49
      %p191 = pneg %p46
      %p192 = scmp.lt.s32.totalorder %s19, 0
      %s193 = scalar_select %p192, %s19, 0
      %s194 = smul.addr %s193, 8
      %s195 = scalar_lea.vmem %s1, %s194
      %p196 = pneg %p75
      %p197 = pneg %p72
      %p198 = scmp.lt.s32.totalorder %s19, 0
      %s199 = scalar_select %p198, %s19, 0
      %s200 = smul.addr %s199, 8
      %s201 = scalar_lea.vmem %s2, %s200
      %p202 = pneg %p101
      %p203 = pneg %p98
      %p204 = pneg %p129
      %p205 = pneg %p126
      %p206 = scmp.lt.s32.totalorder %s18, 1
      %s207 = scalar_select %p206, %s18, 1
      %p208 = scmp.lt.s32.totalorder %s19, 0
      %s209 = scalar_select %p208, %s19, 0
      %s210 = smul.addr %s209, 3
      %s211 = smul.addr %s207, 3
      %s212 = sadd.s32 %s210, %s211
      %s213 = smul.addr %s212, 8
      %s214 = scalar_lea.vmem %s3, %s213
      %p215 = scmp.lt.s32.totalorder %s18, 1
      %s216 = scalar_select %p215, %s18, 1
      %p217 = scmp.lt.s32.totalorder %s19, 0
      %s218 = scalar_select %p217, %s19, 0
      %s219 = smul.addr %s218, 3
      %s220 = smul.addr %s216, 3
      %s221 = sadd.s32 %s219, %s220
      %s222 = smul.addr %s221, 8
      %s223 = scalar_lea.vmem %s0, %s222
      %p224 = scmp.lt.s32.totalorder %s19, 0
      %s225 = scalar_select %p224, %s19, 0
      %s226 = smul.addr %s225, 8
      %s227 = scalar_lea.vmem %s1, %s226
      %p228 = scmp.lt.s32.totalorder %s19, 0
      %s229 = scalar_select %p228, %s19, 0
      %s230 = smul.addr %s229, 8
      %s231 = scalar_lea.vmem %s2, %s230
      %p232 = scmp.lt.s32.totalorder %s18, 1
      %s233 = scalar_select %p232, %s18, 1
      %p234 = scmp.lt.s32.totalorder %s19, 0
      %s235 = scalar_select %p234, %s19, 0
      %s236 = smul.addr %s235, 3
      %s237 = smul.addr %s233, 3
      %s238 = sadd.s32 %s236, %s237
      %s239 = smul.addr %s238, 8
      %s240 = scalar_lea.vmem %s3, %s239
      %v241 = vld [vmem:[%s227] sm:$0xff]
      %v242 = vld [vmem:[%s231] sm:$0xff]
      %v243 = vld [vmem:[%s223] sm:$0xff]
      %v244 = vld [vmem:[%s223 + $0x8] sm:$0xff]
      %v245 = vld [vmem:[%s223 + $0x10] sm:$0xff]
      %247 = vset.pattern.permute.xlu0 0
      %248 = vperm.xlu0 %247, %v241
      %v249 = vpop.permute.xlu0 %248
      %v251 = vmul.f32 %v243, %v249
      %v252 = vmul.f32 %v244, %v249
      %v253 = vmul.f32 %v245, %v249
      %255 = vset.pattern.permute.xlu0 0
      %256 = vperm.xlu0 %255, %v242
      %v257 = vpop.permute.xlu0 %256
      %v259 = vadd.f32 %v251, %v257
      %v260 = vadd.f32 %v252, %v257
      %v261 = vadd.f32 %v253, %v257
      %262 = vst [vmem:[%s240] sm:$0xff] %v259
      %263 = vst [vmem:[%s240 + $0x8] sm:$0xff] %v260
      %264 = vst [vmem:[%s240 + $0x10] sm:$0xff] %v261
      %p265 = scmp.lt.s32.totalorder %s18, 1
      %s266 = scalar_select %p265, %s18, 1
      %p267 = scmp.lt.s32.totalorder %s19, 0
      %s268 = scalar_select %p267, %s19, 0
      %s269 = smul.addr %s268, 3
      %s270 = smul.addr %s266, 3
      %s271 = sadd.s32 %s269, %s270
      %s272 = smul.addr %s271, 8
      %s273 = scalar_lea.vmem %s3, %s272
      // Predicated region
      $region33: #{tcn_forward.3} parent=31 // pred_check
        %p274 = pneg %p126
      $region34: #{tcn_forward.3} parent=31 // pred_check_branch
        %276 = sbr.rel (%p274) target = $region36
      $region35: #{tcn_forward.3} parent=31 // pred_region
        _
      $region36: #{tcn_forward.3} parent=31 // pred_fallthru
        _
    $region32: #{tcn_forward.3} parent=5 // pred_fallthru
      _
    %p277 = scmp.le.s32.totalorder 2, %s9
    // Predicated region
    $region37: #{tcn_forward.3} parent=5 // pred_check
      %p278 = pneg %p277
    $region38: #{tcn_forward.3} parent=5 // pred_check_branch
      %280 = sbr.rel (%p278) target = $region40
    $region39: #{tcn_forward.3} parent=5 // pred_region
      %s281 = ssub.s32 %s9, 2
      // Predicated region
      $region41: #{tcn_forward.3} parent=39 // pred_check
        %p282 = pneg %p132
      $region42: #{tcn_forward.3} parent=39 // pred_check_branch
        %284 = sbr.rel (%p282) target = $region44
      $region43: #{tcn_forward.3} parent=39 // pred_region
        %p285 = scmp.lt.s32.totalorder %s20, 1
        %s286 = scalar_select %p285, %s20, 1
        %p287 = scmp.lt.s32.totalorder %s21, 0
        %s288 = scalar_select %p287, %s21, 0
        %s289 = smul.addr %s288, 3
        %s290 = smul.addr %s286, 3
        %s291 = sadd.s32 %s289, %s290
        %s292 = smul.addr %s291, 8
        %s293 = scalar_lea.vmem %s3, %s292
      $region44: #{tcn_forward.3} parent=39 // pred_fallthru
        _
    $region40: #{tcn_forward.3} parent=5 // pred_fallthru
      _
  $region6: #{tcn_forward.3} parent=0 // loop_footer
    %s13 = sadd.s32 1, %s9
  $region7: #{tcn_forward.3} parent=0 // loop_footer_branch
    %8 = sbr.rel target = $region3
  $region8: #{tcn_forward.3} parent=0 // loop_exit
    _

// kernel: tcn_forward.2
$region0: #{tcn_forward.2}
  #allocation0 [shape = 'u32[]', space=smem, size = 0x4, offset = 0x4, fixed_abs, tag = 'smem constant byte address 0x4 - core index']
  #allocation1 [shape = 'u32[72,128]{1,0:T(1,128)}', space=vmem, size = 0x9000, scoped, tag = 'internal scratch']
  %s0 = inlined_call_operand.vmem [shape: f32[2,8,64], index: 0, kind: input, shape index: {}]
  %s1 = inlined_call_operand.vmem [shape: f32[8,8], index: 1, kind: input, shape index: {}]
  %s2 = inlined_call_operand.vmem [shape: f32[64,1536], index: 2, kind: input, shape index: {}]
  %s3 = inlined_call_operand.vmem [shape: f32[1,1536], index: 3, kind: input, shape index: {}]
  %s4 = inlined_call_operand.vmem [shape: f32[512,224], index: 4, kind: input, shape index: {}]
  %s5 = inlined_call_operand.vmem [shape: f32[224,1152], index: 5, kind: input, shape index: {}]
  %s6 = inlined_call_operand.vmem [shape: f32[1,1152], index: 6, kind: input, shape index: {}]
  %s7 = inlined_call_operand.vmem [shape: f32[2,8,384], index: 7, kind: output, shape index: {0}]
  %s8 = inlined_call_operand.vmem [shape: f32[2,8,1], index: 8, kind: output, shape index: {1}]
  %s9 = inlined_call_operand.vmem [shape: f32[2,8,1], index: 9, kind: output, shape index: {2}]
  %10 = xla_tuple %s7, %s8, %s9
  %s11 = sld [smem:[#allocation0]]
  $region77: #{tcn_forward.2} parent=0
    _
  %s13 = ssub.s32 1, %s11
  %s14 = scalar_select 0, %s13, %s11
  loop: start=0, step=1, limit=4
  $region2: #{tcn_forward.2} parent=0 // loop_pre_header
    _
  $region3: #{tcn_forward.2} parent=0 // loop_header
    %s16 = sphi 0, %s20
    %p17 = scmp.ge.s32.totalorder %s16, 4
    %s26 = sphi 0, %s28
    %s29 = sphi 0, %s26
    %s30 = sphi 0, %s29
    %s46 = sphi 0, %s30
    %s50 = sphi 0, %s50
    %s52 = sphi 0, %s50
    %s53 = sphi 0, %s52
    %s67 = sphi 0, %s53
    %s71 = sphi 0, %s71
    %s73 = sphi 0, %s71
    %s74 = sphi 0, %s73
    %s88 = sphi 0, %s74
    %s92 = sphi 0, %s92
    %s94 = sphi 0, %s92
    %s95 = sphi 0, %s94
    %s109 = sphi 0, %s95
    %s113 = sphi 0, %s113
    %s115 = sphi 0, %s113
    %s116 = sphi 0, %s115
    %s130 = sphi 0, %s116
    %s134 = sphi 0, %s134
    %s136 = sphi 0, %s134
    %s137 = sphi 0, %s136
    %s151 = sphi 0, %s137
    %s155 = sphi 0, %s155
    %s157 = sphi 0, %s155
    %s158 = sphi 0, %s157
    %s172 = sphi 0, %s158
    %s178 = sphi 0, %s180
    %s181 = sphi 0, %s178
    %s182 = sphi 0, %s181
    %s198 = sphi 0, %s182
    %s204 = sphi 0, %s206
    %s207 = sphi 0, %s204
    %s208 = sphi 0, %s207
    %s224 = sphi 0, %s208
    %s230 = sphi 0, %s232
    %s233 = sphi 0, %s230
    %s234 = sphi 0, %s233
    %s250 = sphi 0, %s234
  $region4: #{tcn_forward.2} parent=0 // loop_header_branch
    %19 = sbr.rel (%p17) target = $region8
  $region5: #{tcn_forward.2} parent=0 // loop_body
    %s21 = ssub.s32 %s16, 1
    %s22 = ssub.s32 %s16, 2
    %s23 = sadd.s32 %s16, 1
    %s24 = ssub.s32 %s16, %s23
    %p25 = scmp.eq.s32.totalorder %s24, 0
    %s27 = sadd.s32 %s26, 1
    %s28 = scalar_select %p25, %s26, %s27
    %p31 = pneg %p25
    %p32 = scmp.eq.s32.totalorder %s16, 1
    %p33 = por %p31, %p32
    %p34 = scmp.ne.s32.totalorder %s26, %s29
    %p35 = scmp.eq.s32.totalorder %s16, 0
    %p36 = por %p34, %p35
    %p37 = scmp.ne.s32.totalorder %s26, %s29
    %p38 = scmp.eq.s32.totalorder %s21, 1
    %p39 = por %p37, %p38
    %p40 = scmp.ne.s32.totalorder %s29, %s30
    %p41 = scmp.eq.s32.totalorder %s21, 0
    %p42 = por %p40, %p41
    %p43 = scmp.ne.s32.totalorder %s29, %s30
    %p44 = scmp.eq.s32.totalorder %s22, 1
    %p45 = por %p43, %p44
    %p47 = scmp.ne.s32.totalorder %s30, %s46
    %p48 = scmp.eq.s32.totalorder %s22, 0
    %p49 = por %p47, %p48
    %s51 = sadd.s32 %s50, 1
    %p54 = scmp.eq.s32.totalorder %s16, 1
    %p55 = scmp.ne.s32.totalorder %s50, %s52
    %p56 = scmp.eq.s32.totalorder %s16, 0
    %p57 = por %p55, %p56
    %p58 = scmp.ne.s32.totalorder %s50, %s52
    %p59 = scmp.eq.s32.totalorder %s21, 1
    %p60 = por %p58, %p59
    %p61 = scmp.ne.s32.totalorder %s52, %s53
    %p62 = scmp.eq.s32.totalorder %s21, 0
    %p63 = por %p61, %p62
    %p64 = scmp.ne.s32.totalorder %s52, %s53
    %p65 = scmp.eq.s32.totalorder %s22, 1
    %p66 = por %p64, %p65
    %p68 = scmp.ne.s32.totalorder %s53, %s67
    %p69 = scmp.eq.s32.totalorder %s22, 0
    %p70 = por %p68, %p69
    %s72 = sadd.s32 %s71, 1
    %p75 = scmp.eq.s32.totalorder %s16, 1
    %p76 = scmp.ne.s32.totalorder %s71, %s73
    %p77 = scmp.eq.s32.totalorder %s16, 0
    %p78 = por %p76, %p77
    %p79 = scmp.ne.s32.totalorder %s71, %s73
    %p80 = scmp.eq.s32.totalorder %s21, 1
    %p81 = por %p79, %p80
    %p82 = scmp.ne.s32.totalorder %s73, %s74
    %p83 = scmp.eq.s32.totalorder %s21, 0
    %p84 = por %p82, %p83
    %p85 = scmp.ne.s32.totalorder %s73, %s74
    %p86 = scmp.eq.s32.totalorder %s22, 1
    %p87 = por %p85, %p86
    %p89 = scmp.ne.s32.totalorder %s74, %s88
    %p90 = scmp.eq.s32.totalorder %s22, 0
    %p91 = por %p89, %p90
    %s93 = sadd.s32 %s92, 1
    %p96 = scmp.eq.s32.totalorder %s16, 1
    %p97 = scmp.ne.s32.totalorder %s92, %s94
    %p98 = scmp.eq.s32.totalorder %s16, 0
    %p99 = por %p97, %p98
    %p100 = scmp.ne.s32.totalorder %s92, %s94
    %p101 = scmp.eq.s32.totalorder %s21, 1
    %p102 = por %p100, %p101
    %p103 = scmp.ne.s32.totalorder %s94, %s95
    %p104 = scmp.eq.s32.totalorder %s21, 0
    %p105 = por %p103, %p104
    %p106 = scmp.ne.s32.totalorder %s94, %s95
    %p107 = scmp.eq.s32.totalorder %s22, 1
    %p108 = por %p106, %p107
    %p110 = scmp.ne.s32.totalorder %s95, %s109
    %p111 = scmp.eq.s32.totalorder %s22, 0
    %p112 = por %p110, %p111
    %s114 = sadd.s32 %s113, 1
    %p117 = scmp.eq.s32.totalorder %s16, 1
    %p118 = scmp.ne.s32.totalorder %s113, %s115
    %p119 = scmp.eq.s32.totalorder %s16, 0
    %p120 = por %p118, %p119
    %p121 = scmp.ne.s32.totalorder %s113, %s115
    %p122 = scmp.eq.s32.totalorder %s21, 1
    %p123 = por %p121, %p122
    %p124 = scmp.ne.s32.totalorder %s115, %s116
    %p125 = scmp.eq.s32.totalorder %s21, 0
    %p126 = por %p124, %p125
    %p127 = scmp.ne.s32.totalorder %s115, %s116
    %p128 = scmp.eq.s32.totalorder %s22, 1
    %p129 = por %p127, %p128
    %p131 = scmp.ne.s32.totalorder %s116, %s130
    %p132 = scmp.eq.s32.totalorder %s22, 0
    %p133 = por %p131, %p132
    %s135 = sadd.s32 %s134, 1
    %p138 = scmp.eq.s32.totalorder %s16, 1
    %p139 = scmp.ne.s32.totalorder %s134, %s136
    %p140 = scmp.eq.s32.totalorder %s16, 0
    %p141 = por %p139, %p140
    %p142 = scmp.ne.s32.totalorder %s134, %s136
    %p143 = scmp.eq.s32.totalorder %s21, 1
    %p144 = por %p142, %p143
    %p145 = scmp.ne.s32.totalorder %s136, %s137
    %p146 = scmp.eq.s32.totalorder %s21, 0
    %p147 = por %p145, %p146
    %p148 = scmp.ne.s32.totalorder %s136, %s137
    %p149 = scmp.eq.s32.totalorder %s22, 1
    %p150 = por %p148, %p149
    %p152 = scmp.ne.s32.totalorder %s137, %s151
    %p153 = scmp.eq.s32.totalorder %s22, 0
    %p154 = por %p152, %p153
    %s156 = sadd.s32 %s155, 1
    %p159 = scmp.eq.s32.totalorder %s16, 1
    %p160 = scmp.ne.s32.totalorder %s155, %s157
    %p161 = scmp.eq.s32.totalorder %s16, 0
    %p162 = por %p160, %p161
    %p163 = scmp.ne.s32.totalorder %s155, %s157
    %p164 = scmp.eq.s32.totalorder %s21, 1
    %p165 = por %p163, %p164
    %p166 = scmp.ne.s32.totalorder %s157, %s158
    %p167 = scmp.eq.s32.totalorder %s21, 0
    %p168 = por %p166, %p167
    %p169 = scmp.ne.s32.totalorder %s157, %s158
    %p170 = scmp.eq.s32.totalorder %s22, 1
    %p171 = por %p169, %p170
    %p173 = scmp.ne.s32.totalorder %s158, %s172
    %p174 = scmp.eq.s32.totalorder %s22, 0
    %p175 = por %p173, %p174
    %s176 = ssub.s32 %s16, %s23
    %p177 = scmp.eq.s32.totalorder %s176, 0
    %s179 = sadd.s32 %s178, 1
    %s180 = scalar_select %p177, %s178, %s179
    %p183 = pneg %p177
    %p184 = scmp.eq.s32.totalorder %s16, 1
    %p185 = por %p183, %p184
    %p186 = scmp.ne.s32.totalorder %s178, %s181
    %p187 = scmp.eq.s32.totalorder %s16, 0
    %p188 = por %p186, %p187
    %p189 = scmp.ne.s32.totalorder %s178, %s181
    %p190 = scmp.eq.s32.totalorder %s21, 1
    %p191 = por %p189, %p190
    %p192 = scmp.ne.s32.totalorder %s181, %s182
    %p193 = scmp.eq.s32.totalorder %s21, 0
    %p194 = por %p192, %p193
    %p195 = scmp.ne.s32.totalorder %s181, %s182
    %p196 = scmp.eq.s32.totalorder %s22, 1
    %p197 = por %p195, %p196
    %p199 = scmp.ne.s32.totalorder %s182, %s198
    %p200 = scmp.eq.s32.totalorder %s22, 0
    %p201 = por %p199, %p200
    %s202 = ssub.s32 %s16, %s23
    %p203 = scmp.eq.s32.totalorder %s202, 0
    %s205 = sadd.s32 %s204, 1
    %s206 = scalar_select %p203, %s204, %s205
    %p209 = pneg %p203
    %p210 = scmp.eq.s32.totalorder %s16, 1
    %p211 = por %p209, %p210
    %p212 = scmp.ne.s32.totalorder %s204, %s207
    %p213 = scmp.eq.s32.totalorder %s16, 0
    %p214 = por %p212, %p213
    %p215 = scmp.ne.s32.totalorder %s204, %s207
    %p216 = scmp.eq.s32.totalorder %s21, 1
    %p217 = por %p215, %p216
    %p218 = scmp.ne.s32.totalorder %s207, %s208
    %p219 = scmp.eq.s32.totalorder %s21, 0
    %p220 = por %p218, %p219
    %p221 = scmp.ne.s32.totalorder %s207, %s208
    %p222 = scmp.eq.s32.totalorder %s22, 1
    %p223 = por %p221, %p222
    %p225 = scmp.ne.s32.totalorder %s208, %s224
    %p226 = scmp.eq.s32.totalorder %s22, 0
    %p227 = por %p225, %p226
    %s228 = ssub.s32 %s16, %s23
    %p229 = scmp.eq.s32.totalorder %s228, 0
    %s231 = sadd.s32 %s230, 1
    %s232 = scalar_select %p229, %s230, %s231
    %p235 = pneg %p229
    %p236 = scmp.eq.s32.totalorder %s16, 1
    %p237 = por %p235, %p236
    %p238 = scmp.ne.s32.totalorder %s230, %s233
    %p239 = scmp.eq.s32.totalorder %s16, 0
    %p240 = por %p238, %p239
    %p241 = scmp.ne.s32.totalorder %s230, %s233
    %p242 = scmp.eq.s32.totalorder %s21, 1
    %p243 = por %p241, %p242
    %p244 = scmp.ne.s32.totalorder %s233, %s234
    %p245 = scmp.eq.s32.totalorder %s21, 0
    %p246 = por %p244, %p245
    %p247 = scmp.ne.s32.totalorder %s233, %s234
    %p248 = scmp.eq.s32.totalorder %s22, 1
    %p249 = por %p247, %p248
    %p251 = scmp.ne.s32.totalorder %s234, %s250
    %p252 = scmp.eq.s32.totalorder %s22, 0
    %p253 = por %p251, %p252
    %p254 = scmp.le.s32.totalorder 1, %s16
    %p255 = scmp.lt.s32.totalorder %s16, 3
    %p256 = pnand %p254, %p255
    %p257 = pneg %p256
    // Predicated region
    $region9: #{tcn_forward.2} parent=5 // pred_check
      _
    $region10: #{tcn_forward.2} parent=5 // pred_check_branch
      %259 = sbr.rel (%p256) target = $region12
    $region11: #{tcn_forward.2} parent=5 // pred_region
      %s260 = ssub.s32 %s16, 1
      // Predicated region
      $region13: #{tcn_forward.2} parent=11 // pred_check
        %p261 = pneg %p63
      $region14: #{tcn_forward.2} parent=11 // pred_check_branch
        %263 = sbr.rel (%p261) target = $region16
      $region15: #{tcn_forward.2} parent=11 // pred_region
        _
      $region16: #{tcn_forward.2} parent=11 // pred_fallthru
        _
      // Predicated region
      $region17: #{tcn_forward.2} parent=11 // pred_check
        %p264 = pneg %p84
      $region18: #{tcn_forward.2} parent=11 // pred_check_branch
        %266 = sbr.rel (%p264) target = $region20
      $region19: #{tcn_forward.2} parent=11 // pred_region
        _
      $region20: #{tcn_forward.2} parent=11 // pred_fallthru
        _
      // Predicated region
      $region21: #{tcn_forward.2} parent=11 // pred_check
        %p267 = pneg %p105
      $region22: #{tcn_forward.2} parent=11 // pred_check_branch
        %269 = sbr.rel (%p267) target = $region24
      $region23: #{tcn_forward.2} parent=11 // pred_region
        _
      $region24: #{tcn_forward.2} parent=11 // pred_fallthru
        _
      // Predicated region
      $region25: #{tcn_forward.2} parent=11 // pred_check
        %p270 = pneg %p126
      $region26: #{tcn_forward.2} parent=11 // pred_check_branch
        %272 = sbr.rel (%p270) target = $region28
      $region27: #{tcn_forward.2} parent=11 // pred_region
        _
      $region28: #{tcn_forward.2} parent=11 // pred_fallthru
        _
      // Predicated region
      $region29: #{tcn_forward.2} parent=11 // pred_check
        %p273 = pneg %p147
      $region30: #{tcn_forward.2} parent=11 // pred_check_branch
        %275 = sbr.rel (%p273) target = $region32
      $region31: #{tcn_forward.2} parent=11 // pred_region
        _
      $region32: #{tcn_forward.2} parent=11 // pred_fallthru
        _
      // Predicated region
      $region33: #{tcn_forward.2} parent=11 // pred_check
        %p276 = pneg %p168
      $region34: #{tcn_forward.2} parent=11 // pred_check_branch
        %278 = sbr.rel (%p276) target = $region36
      $region35: #{tcn_forward.2} parent=11 // pred_region
        _
      $region36: #{tcn_forward.2} parent=11 // pred_fallthru
        _
    $region12: #{tcn_forward.2} parent=5 // pred_fallthru
      _
    %p279 = scmp.lt.s32.totalorder %s16, 2
    // Predicated region
    $region37: #{tcn_forward.2} parent=5 // pred_check
      %p280 = pneg %p279
    $region38: #{tcn_forward.2} parent=5 // pred_check_branch
      %282 = sbr.rel (%p280) target = $region40
    $region39: #{tcn_forward.2} parent=5 // pred_region
      // Predicated region
      $region41: #{tcn_forward.2} parent=39 // pred_check
        %p283 = pneg %p36
      $region42: #{tcn_forward.2} parent=39 // pred_check_branch
        %285 = sbr.rel (%p283) target = $region44
      $region43: #{tcn_forward.2} parent=39 // pred_region
        %p286 = scmp.lt.s32.totalorder %s16, 1
        %s287 = scalar_select %p286, %s16, 1
        %s288 = smul.addr %s287, 8
        %s289 = scalar_lea.vmem %s0, %s288
      $region44: #{tcn_forward.2} parent=39 // pred_fallthru
        _
    $region40: #{tcn_forward.2} parent=5 // pred_fallthru
      _
    %p290 = scmp.le.s32.totalorder 1, %s16
    %p291 = scmp.lt.s32.totalorder %s16, 3
    %p292 = pnand %p290, %p291
    %p293 = pneg %p292
    // Predicated region
    $region45: #{tcn_forward.2} parent=5 // pred_check
      _
    $region46: #{tcn_forward.2} parent=5 // pred_check_branch
      %295 = sbr.rel (%p292) target = $region48
    $region47: #{tcn_forward.2} parent=5 // pred_region
      %s296 = ssub.s32 %s16, 1
      %p297 = scmp.lt.s32.totalorder %s21, 1
      %s298 = scalar_select %p297, %s21, 1
      %s299 = smul.addr %s298, 8
      %s300 = scalar_lea.vmem %s0, %s299
      %p301 = pneg %p42
      %p302 = pneg %p39
      %p303 = pneg %p63
      %p304 = pneg %p60
      %p305 = pneg %p84
      %p306 = pneg %p81
      %p307 = pneg %p105
      %p308 = pneg %p102
      %p309 = pneg %p126
      %p310 = pneg %p123
      %p311 = pneg %p147
      %p312 = pneg %p144
      %p313 = pneg %p168
      %p314 = pneg %p165
      %p315 = pneg %p194
      %p316 = pneg %p191
      %p317 = scmp.lt.s32.totalorder %s21, 1
      %s318 = scalar_select %p317, %s21, 1
      %s319 = smul.addr %s318, 3
      %s320 = smul.addr %s319, 8
      %s321 = scalar_lea.vmem %s7, %s320
      %p322 = pneg %p220
      %p323 = pneg %p217
      %p324 = scmp.lt.s32.totalorder %s21, 1
      %s325 = scalar_select %p324, %s21, 1
      %s326 = smul.addr %s325, 8
      %s327 = scalar_lea.vmem %s8, %s326
      %p328 = pneg %p246
      %p329 = pneg %p243
      %p330 = scmp.lt.s32.totalorder %s21, 1
      %s331 = scalar_select %p330, %s21, 1
      %s332 = smul.addr %s331, 8
      %s333 = scalar_lea.vmem %s9, %s332
      %p334 = scmp.lt.s32.totalorder %s21, 1
      %s335 = scalar_select %p334, %s21, 1
      %s336 = smul.addr %s335, 8
      %s337 = scalar_lea.vmem %s0, %s336
      %p338 = scmp.lt.s32.totalorder %s21, 1
      %s339 = scalar_select %p338, %s21, 1
      %s340 = smul.addr %s339, 3
      %s341 = smul.addr %s340, 8
      %s342 = scalar_lea.vmem %s7, %s341
      %p343 = scmp.lt.s32.totalorder %s21, 1
      %s344 = scalar_select %p343, %s21, 1
      %s345 = smul.addr %s344, 8
      %s346 = scalar_lea.vmem %s8, %s345
      %p347 = scmp.lt.s32.totalorder %s21, 1
      %s348 = scalar_select %p347, %s21, 1
      %s349 = smul.addr %s348, 8
      %s350 = scalar_lea.vmem %s9, %s349
      %v351 = vld [vmem:[%s337] sm:$0xff]
      %v352 = vld [vmem:[%s2] sm:$0xff]
      %v353 = vld [vmem:[%s2 + $0x8] sm:$0xff]
      %v354 = vld [vmem:[%s2 + $0x10] sm:$0xff]
      %v355 = vld [vmem:[%s2 + $0x18] sm:$0xff]
      %v356 = vld [vmem:[%s2 + $0x20] sm:$0xff]
      %v357 = vld [vmem:[%s2 + $0x28] sm:$0xff]
      %v358 = vld [vmem:[%s2 + $0x30] sm:$0xff]
      %v359 = vld [vmem:[%s2 + $0x38] sm:$0xff]
      %v360 = vld [vmem:[%s2 + $0x40] sm:$0xff]
      %v361 = vld [vmem:[%s2 + $0x48] sm:$0xff]
      %v362 = vld [vmem:[%s2 + $0x50] sm:$0xff]
      %v363 = vld [vmem:[%s2 + $0x58] sm:$0xff]
      %v364 = vld [vmem:[%s2 + $0x60] sm:$0xff]
      %v365 = vld [vmem:[%s2 + $0x68] sm:$0xff]
      %v366 = vld [vmem:[%s2 + $0x70] sm:$0xff]
      %v367 = vld [vmem:[%s2 + $0x78] sm:$0xff]
      %v368 = vld [vmem:[%s2 + $0x80] sm:$0xff]
      %v369 = vld [vmem:[%s2 + $0x88] sm:$0xff]
      %v370 = vld [vmem:[%s2 + $0x90] sm:$0xff]
      %v371 = vld [vmem:[%s2 + $0x98] sm:$0xff]
      %v372 = vld [vmem:[%s2 + $0xa0] sm:$0xff]
      %v373 = vld [vmem:[%s2 + $0xa8] sm:$0xff]
      %v374 = vld [vmem:[%s2 + $0xb0] sm:$0xff]
      %v375 = vld [vmem:[%s2 + $0xb8] sm:$0xff]
      %v376 = vld [vmem:[%s2 + $0xc0] sm:$0xff]
      %v377 = vld [vmem:[%s2 + $0xc8] sm:$0xff]
      %v378 = vld [vmem:[%s2 + $0xd0] sm:$0xff]
      %v379 = vld [vmem:[%s2 + $0xd8] sm:$0xff]
      %v380 = vld [vmem:[%s2 + $0xe0] sm:$0xff]
      %v381 = vld [vmem:[%s2 + $0xe8] sm:$0xff]
      %v382 = vld [vmem:[%s2 + $0xf0] sm:$0xff]
      %v383 = vld [vmem:[%s2 + $0xf8] sm:$0xff]
      %v384 = vld [vmem:[%s2 + $0x100] sm:$0xff]
      %v385 = vld [vmem:[%s2 + $0x108] sm:$0xff]
      %v386 = vld [vmem:[%s2 + $0x110] sm:$0xff]
      %v387 = vld [vmem:[%s2 + $0x118] sm:$0xff]
      %v388 = vld [vmem:[%s2 + $0x120] sm:$0xff]
      %v389 = vld [vmem:[%s2 + $0x128] sm:$0xff]
      %v390 = vld [vmem:[%s2 + $0x130] sm:$0xff]
      %v391 = vld [vmem:[%s2 + $0x138] sm:$0xff]
      %v392 = vld [vmem:[%s2 + $0x140] sm:$0xff]
      %v393 = vld [vmem:[%s2 + $0x148] sm:$0xff]
      %v394 = vld [vmem:[%s2 + $0x150] sm:$0xff]
      %v395 = vld [vmem:[%s2 + $0x158] sm:$0xff]
      %v396 = vld [vmem:[%s2 + $0x160] sm:$0xff]
      %v397 = vld [vmem:[%s2 + $0x168] sm:$0xff]
      %v398 = vld [vmem:[%s2 + $0x170] sm:$0xff]
      %v399 = vld [vmem:[%s2 + $0x178] sm:$0xff]
      %v400 = vld [vmem:[%s2 + $0x180] sm:$0xff]
      %v401 = vld [vmem:[%s2 + $0x188] sm:$0xff]
      %v402 = vld [vmem:[%s2 + $0x190] sm:$0xff]
      %v403 = vld [vmem:[%s2 + $0x198] sm:$0xff]
      %v404 = vld [vmem:[%s2 + $0x1a0] sm:$0xff]
      %v405 = vld [vmem:[%s2 + $0x1a8] sm:$0xff]
      %v406 = vld [vmem:[%s2 + $0x1b0] sm:$0xff]
      %v407 = vld [vmem:[%s2 + $0x1b8] sm:$0xff]
      %v408 = vld [vmem:[%s2 + $0x1c0] sm:$0xff]
      %v409 = vld [vmem:[%s2 + $0x1c8] sm:$0xff]
      %v410 = vld [vmem:[%s2 + $0x1d0] sm:$0xff]
      %v411 = vld [vmem:[%s2 + $0x1d8] sm:$0xff]
      %v412 = vld [vmem:[%s2 + $0x1e0] sm:$0xff]
      %v413 = vld [vmem:[%s2 + $0x1e8] sm:$0xff]
      %v414 = vld [vmem:[%s2 + $0x1f0] sm:$0xff]
      %v415 = vld [vmem:[%s2 + $0x1f8] sm:$0xff]
      %v416 = vld [vmem:[%s2 + $0x200] sm:$0xff]
      %v417 = vld [vmem:[%s2 + $0x208] sm:$0xff]
      %v418 = vld [vmem:[%s2 + $0x210] sm:$0xff]
      %v419 = vld [vmem:[%s2 + $0x218] sm:$0xff]
      %v420 = vld [vmem:[%s2 + $0x220] sm:$0xff]
      %v421 = vld [vmem:[%s2 + $0x228] sm:$0xff]
      %v422 = vld [vmem:[%s2 + $0x230] sm:$0xff]
      %v423 = vld [vmem:[%s2 + $0x238] sm:$0xff]
      %v424 = vld [vmem:[%s2 + $0x240] sm:$0xff]
      %v425 = vld [vmem:[%s2 + $0x248] sm:$0xff]
      %v426 = vld [vmem:[%s2 + $0x250] sm:$0xff]
      %v427 = vld [vmem:[%s2 + $0x258] sm:$0xff]
      %v428 = vld [vmem:[%s2 + $0x260] sm:$0xff]
      %v429 = vld [vmem:[%s2 + $0x268] sm:$0xff]
      %v430 = vld [vmem:[%s2 + $0x270] sm:$0xff]
      %v431 = vld [vmem:[%s2 + $0x278] sm:$0xff]
      %v432 = vld [vmem:[%s2 + $0x280] sm:$0xff]
      %v433 = vld [vmem:[%s2 + $0x288] sm:$0xff]
      %v434 = vld [vmem:[%s2 + $0x290] sm:$0xff]
      %v435 = vld [vmem:[%s2 + $0x298] sm:$0xff]
      %v436 = vld [vmem:[%s2 + $0x2a0] sm:$0xff]
      %v437 = vld [vmem:[%s2 + $0x2a8] sm:$0xff]
      %v438 = vld [vmem:[%s2 + $0x2b0] sm:$0xff]
      %v439 = vld [vmem:[%s2 + $0x2b8] sm:$0xff]
      %v440 = vld [vmem:[%s2 + $0x2c0] sm:$0xff]
      %v441 = vld [vmem:[%s2 + $0x2c8] sm:$0xff]
      %v442 = vld [vmem:[%s2 + $0x2d0] sm:$0xff]
      %v443 = vld [vmem:[%s2 + $0x2d8] sm:$0xff]
      %v444 = vld [vmem:[%s2 + $0x2e0] sm:$0xff]
      %v445 = vld [vmem:[%s2 + $0x2e8] sm:$0xff]
      %v446 = vld [vmem:[%s2 + $0x2f0] sm:$0xff]
      %v447 = vld [vmem:[%s2 + $0x2f8] sm:$0xff]
      %v448 = vld [vmem:[%s3] sm:$0xff]
      %v449 = vld [vmem:[%s3 + $0x8] sm:$0xf]
      %v452 = vperm.slane %v448, 0
      %v453 = vperm.slane %v448, 1
      %v454 = vperm.slane %v448, 2
      %v455 = vperm.slane %v448, 3
      %v456 = vperm.slane %v448, 4
      %v457 = vperm.slane %v448, 5
      %v458 = vperm.slane %v448, 6
      %v459 = vperm.slane %v448, 7
      %v460 = vperm.slane %v449, 0
      %v461 = vperm.slane %v449, 1
      %v462 = vperm.slane %v449, 2
      %v463 = vperm.slane %v449, 3
      %vm476 = vcmask 523264
      %v478 = vsel %vm476, %v351, 0
      %480 = vmatpush.msra.mxu0 0.0
      %481 = vmatpush.msra.mxu0 0.0
      %482 = vmatpush.msra.mxu0 0.0
      %483 = vmatpush.msra.mxu0 0.0
      %484 = vmatpush.msra.mxu0 0.0
      %485 = vmatpush.msra.mxu0 0.0
      %486 = vmatpush.msra.mxu0 0.0
      %487 = vmatpush.msra.mxu0 0.0
      %488 = vmatpush.msra.mxu0 %v436
      %489 = vmatpush.msra.mxu0 %v424
      %490 = vmatpush.msra.mxu0 %v412
      %491 = vmatpush.msra.mxu0 %v400
      %492 = vmatpush.msra.mxu0 %v388
      %493 = vmatpush.msra.mxu0 %v376
      %494 = vmatpush.msra.mxu0 %v364
      %495 = vmatpush.msra.mxu0 %v352
      %496 = vmatmul.f32.gmra.mxu0 %v478
      %v497 = vpop.f32.mrf.mxu0
      %v498 = vadd.f32 %v452, %v497
      %499 = vdwg.mxu0
      %500 = vmatpush.msra.mxu0 0.0
      %501 = vmatpush.msra.mxu0 0.0
      %502 = vmatpush.msra.mxu0 0.0
      %503 = vmatpush.msra.mxu0 0.0
      %504 = vmatpush.msra.mxu0 0.0
      %505 = vmatpush.msra.mxu0 0.0
      %506 = vmatpush.msra.mxu0 0.0
      %507 = vmatpush.msra.mxu0 0.0
      %508 = vmatpush.msra.mxu0 %v437
      %509 = vmatpush.msra.mxu0 %v425
      %510 = vmatpush.msra.mxu0 %v413
      %511 = vmatpush.msra.mxu0 %v401
      %512 = vmatpush.msra.mxu0 %v389
      %513 = vmatpush.msra.mxu0 %v377
      %514 = vmatpush.msra.mxu0 %v365
      %515 = vmatpush.msra.mxu0 %v353
      %516 = vmatmul.f32.gmra.mxu0 %v478
      %v517 = vpop.f32.mrf.mxu0
      %v518 = vadd.f32 %v453, %v517
      %519 = vdwg.mxu0
      %520 = vmatpush.msra.mxu0 0.0
      %521 = vmatpush.msra.mxu0 0.0
      %522 = vmatpush.msra.mxu0 0.0
      %523 = vmatpush.msra.mxu0 0.0
      %524 = vmatpush.msra.mxu0 0.0
      %525 = vmatpush.msra.mxu0 0.0
      %526 = vmatpush.msra.mxu0 0.0
      %527 = vmatpush.msra.mxu0 0.0
      %528 = vmatpush.msra.mxu0 %v438
      %529 = vmatpush.msra.mxu0 %v426
      %530 = vmatpush.msra.mxu0 %v414
      %531 = vmatpush.msra.mxu0 %v402
      %532 = vmatpush.msra.mxu0 %v390
      %533 = vmatpush.msra.mxu0 %v378
      %534 = vmatpush.msra.mxu0 %v366
      %535 = vmatpush.msra.mxu0 %v354
      %536 = vmatmul.f32.gmra.mxu0 %v478
      %v537 = vpop.f32.mrf.mxu0
      %v538 = vadd.f32 %v454, %v537
      %539 = vdwg.mxu0
      %540 = vmatpush.msra.mxu0 0.0
      %541 = vmatpush.msra.mxu0 0.0
      %542 = vmatpush.msra.mxu0 0.0
      %543 = vmatpush.msra.mxu0 0.0
      %544 = vmatpush.msra.mxu0 0.0
      %545 = vmatpush.msra.mxu0 0.0
      %546 = vmatpush.msra.mxu0 0.0
      %547 = vmatpush.msra.mxu0 0.0
      %548 = vmatpush.msra.mxu0 %v439
      %549 = vmatpush.msra.mxu0 %v427
      %550 = vmatpush.msra.mxu0 %v415
      %551 = vmatpush.msra.mxu0 %v403
      %552 = vmatpush.msra.mxu0 %v391
      %553 = vmatpush.msra.mxu0 %v379
      %554 = vmatpush.msra.mxu0 %v367
      %555 = vmatpush.msra.mxu0 %v355
      %556 = vmatmul.f32.gmra.mxu0 %v478
      %v557 = vpop.f32.mrf.mxu0
      %v558 = vadd.f32 %v455, %v557
      %559 = vdwg.mxu0
      %560 = vmatpush.msra.mxu0 0.0
      %561 = vmatpush.msra.mxu0 0.0
      %562 = vmatpush.msra.mxu0 0.0
      %563 = vmatpush.msra.mxu0 0.0
      %564 = vmatpush.msra.mxu0 0.0
      %565 = vmatpush.msra.mxu0 0.0
      %566 = vmatpush.msra.mxu0 0.0
      %567 = vmatpush.msra.mxu0 0.0
      %568 = vmatpush.msra.mxu0 %v440
      %569 = vmatpush.msra.mxu0 %v428
      %570 = vmatpush.msra.mxu0 %v416
      %571 = vmatpush.msra.mxu0 %v404
      %572 = vmatpush.msra.mxu0 %v392
      %573 = vmatpush.msra.mxu0 %v380
      %574 = vmatpush.msra.mxu0 %v368
      %575 = vmatpush.msra.mxu0 %v356
      %576 = vmatmul.f32.gmra.mxu0 %v478
      %v577 = vpop.f32.mrf.mxu0
      %v578 = vadd.f32 %v456, %v577
      %579 = vdwg.mxu0
      %580 = vmatpush.msra.mxu0 0.0
      %581 = vmatpush.msra.mxu0 0.0
      %582 = vmatpush.msra.mxu0 0.0
      %583 = vmatpush.msra.mxu0 0.0
      %584 = vmatpush.msra.mxu0 0.0
      %585 = vmatpush.msra.mxu0 0.0
      %586 = vmatpush.msra.mxu0 0.0
      %587 = vmatpush.msra.mxu0 0.0
      %588 = vmatpush.msra.mxu0 %v441
      %589 = vmatpush.msra.mxu0 %v429
      %590 = vmatpush.msra.mxu0 %v417
      %591 = vmatpush.msra.mxu0 %v405
      %592 = vmatpush.msra.mxu0 %v393
      %593 = vmatpush.msra.mxu0 %v381
      %594 = vmatpush.msra.mxu0 %v369
      %595 = vmatpush.msra.mxu0 %v357
      %596 = vmatmul.f32.gmra.mxu0 %v478
      %v597 = vpop.f32.mrf.mxu0
      %v598 = vadd.f32 %v457, %v597
      %599 = vdwg.mxu0
      %600 = vmatpush.msra.mxu0 0.0
      %601 = vmatpush.msra.mxu0 0.0
      %602 = vmatpush.msra.mxu0 0.0
      %603 = vmatpush.msra.mxu0 0.0
      %604 = vmatpush.msra.mxu0 0.0
      %605 = vmatpush.msra.mxu0 0.0
      %606 = vmatpush.msra.mxu0 0.0
      %607 = vmatpush.msra.mxu0 0.0
      %608 = vmatpush.msra.mxu0 %v442
      %609 = vmatpush.msra.mxu0 %v430
      %610 = vmatpush.msra.mxu0 %v418
      %611 = vmatpush.msra.mxu0 %v406
      %612 = vmatpush.msra.mxu0 %v394
      %613 = vmatpush.msra.mxu0 %v382
      %614 = vmatpush.msra.mxu0 %v370
      %615 = vmatpush.msra.mxu0 %v358
      %616 = vmatmul.f32.gmra.mxu0 %v478
      %v617 = vpop.f32.mrf.mxu0
      %v618 = vadd.f32 %v458, %v617
      %619 = vdwg.mxu0
      %620 = vmatpush.msra.mxu0 0.0
      %621 = vmatpush.msra.mxu0 0.0
      %622 = vmatpush.msra.mxu0 0.0
      %623 = vmatpush.msra.mxu0 0.0
      %624 = vmatpush.msra.mxu0 0.0
      %625 = vmatpush.msra.mxu0 0.0
      %626 = vmatpush.msra.mxu0 0.0
      %627 = vmatpush.msra.mxu0 0.0
      %628 = vmatpush.msra.mxu0 %v443
      %629 = vmatpush.msra.mxu0 %v431
      %630 = vmatpush.msra.mxu0 %v419
      %631 = vmatpush.msra.mxu0 %v407
      %632 = vmatpush.msra.mxu0 %v395
      %633 = vmatpush.msra.mxu0 %v383
      %634 = vmatpush.msra.mxu0 %v371
      %635 = vmatpush.msra.mxu0 %v359
      %636 = vmatmul.f32.gmra.mxu0 %v478
      %v637 = vpop.f32.mrf.mxu0
      %v638 = vadd.f32 %v459, %v637
      %639 = vdwg.mxu0
      %640 = vmatpush.msra.mxu0 0.0
      %641 = vmatpush.msra.mxu0 0.0
      %642 = vmatpush.msra.mxu0 0.0
      %643 = vmatpush.msra.mxu0 0.0
      %644 = vmatpush.msra.mxu0 0.0
      %645 = vmatpush.msra.mxu0 0.0
      %646 = vmatpush.msra.mxu0 0.0
      %647 = vmatpush.msra.mxu0 0.0
      %648 = vmatpush.msra.mxu0 %v444
      %649 = vmatpush.msra.mxu0 %v432
      %650 = vmatpush.msra.mxu0 %v420
      %651 = vmatpush.msra.mxu0 %v408
      %652 = vmatpush.msra.mxu0 %v396
      %653 = vmatpush.msra.mxu0 %v384
      %654 = vmatpush.msra.mxu0 %v372
      %655 = vmatpush.msra.mxu0 %v360
      %656 = vmatmul.f32.gmra.mxu0 %v478
      %v657 = vpop.f32.mrf.mxu0
      %v658 = vadd.f32 %v460, %v657
      %659 = vdwg.mxu0
      %660 = vmatpush.msra.mxu0 0.0
      %661 = vmatpush.msra.mxu0 0.0
      %662 = vmatpush.msra.mxu0 0.0
      %663 = vmatpush.msra.mxu0 0.0
      %664 = vmatpush.msra.mxu0 0.0
      %665 = vmatpush.msra.mxu0 0.0
      %666 = vmatpush.msra.mxu0 0.0
      %667 = vmatpush.msra.mxu0 0.0
      %668 = vmatpush.msra.mxu0 %v445
      %669 = vmatpush.msra.mxu0 %v433
      %670 = vmatpush.msra.mxu0 %v421
      %671 = vmatpush.msra.mxu0 %v409
      %672 = vmatpush.msra.mxu0 %v397
      %673 = vmatpush.msra.mxu0 %v385
      %674 = vmatpush.msra.mxu0 %v373
      %675 = vmatpush.msra.mxu0 %v361
      %676 = vmatmul.f32.gmra.mxu0 %v478
      %v677 = vpop.f32.mrf.mxu0
      %v678 = vadd.f32 %v461, %v677
      %679 = vdwg.mxu0
      %680 = vmatpush.msra.mxu0 0.0
      %681 = vmatpush.msra.mxu0 0.0
      %682 = vmatpush.msra.mxu0 0.0
      %683 = vmatpush.msra.mxu0 0.0
      %684 = vmatpush.msra.mxu0 0.0
      %685 = vmatpush.msra.mxu0 0.0
      %686 = vmatpush.msra.mxu0 0.0
      %687 = vmatpush.msra.mxu0 0.0
      %688 = vmatpush.msra.mxu0 %v446
      %689 = vmatpush.msra.mxu0 %v434
      %690 = vmatpush.msra.mxu0 %v422
      %691 = vmatpush.msra.mxu0 %v410
      %692 = vmatpush.msra.mxu0 %v398
      %693 = vmatpush.msra.mxu0 %v386
      %694 = vmatpush.msra.mxu0 %v374
      %695 = vmatpush.msra.mxu0 %v362
      %696 = vmatmul.f32.gmra.mxu0 %v478
      %v697 = vpop.f32.mrf.mxu0
      %v698 = vadd.f32 %v462, %v697
      %699 = vdwg.mxu0
      %700 = vmatpush.msra.mxu0 0.0
      %701 = vmatpush.msra.mxu0 0.0
      %702 = vmatpush.msra.mxu0 0.0
      %703 = vmatpush.msra.mxu0 0.0
      %704 = vmatpush.msra.mxu0 0.0
      %705 = vmatpush.msra.mxu0 0.0
      %706 = vmatpush.msra.mxu0 0.0
      %707 = vmatpush.msra.mxu0 0.0
      %708 = vmatpush.msra.mxu0 %v447
      %709 = vmatpush.msra.mxu0 %v435
      %710 = vmatpush.msra.mxu0 %v423
      %711 = vmatpush.msra.mxu0 %v411
      %712 = vmatpush.msra.mxu0 %v399
      %713 = vmatpush.msra.mxu0 %v387
      %714 = vmatpush.msra.mxu0 %v375
      %715 = vmatpush.msra.mxu0 %v363
      %716 = vmatmul.f32.gmra.mxu0 %v478
      %v717 = vpop.f32.mrf.mxu0
      %v718 = vadd.f32 %v463, %v717
      %719 = vdwg.mxu0
      %v720 = vxor.u32 %v578, 2147483648
      %v721 = vxor.u32 %v598, 2147483648
      %v722 = vxor.u32 %v618, 2147483648
      %v723 = vxor.u32 %v638, 2147483648
      %v724 = vmul.f32 %v720, 1.442695
      %v725 = vpow.pop %v724
      %v726 = vmul.f32 %v721, 1.442695
      %v727 = vpow.pop %v726
      %v728 = vmul.f32 %v722, 1.442695
      %v729 = vpow.pop %v728
      %v730 = vmul.f32 %v723, 1.442695
      %v731 = vpow.pop %v730
      %v732 = vadd.f32 %v725, 1.0
      %v733 = vadd.f32 %v727, 1.0
      %v734 = vadd.f32 %v729, 1.0
      %v735 = vadd.f32 %v731, 1.0
      %v736 = vrcp.pop %v732
      %v737 = vmul.f32 %v732, %v736
      %v738 = vsub.f32 1.0, %v737
      %v739 = vmul.f32 %v736, %v738
      %v740 = vadd.f32 %v736, %v739
      %vm741 = vweird.f32 %v732
      %vm742 = vweird.f32 %v736
      %vm743 = vmor %vm741, %vm742
      %v744 = vsel %vm743, %v736, %v740
      %v745 = vand.u32 2147483647, %v732
      %vm746 = vcmp.eq.f32.partialorder %v745, 8.507059e+37
      %v747 = vand.u32 %v732, 2147483648
      %v748 = vor.u32 1.1754944e-38, %v747
      %v749 = vsel %vm746, %v748, %v744
      %v750 = vmul.f32 1.0, %v749
      %v751 = vrcp.pop %v733
      %v752 = vmul.f32 %v733, %v751
      %v753 = vsub.f32 1.0, %v752
      %v754 = vmul.f32 %v751, %v753
      %v755 = vadd.f32 %v751, %v754
      %vm756 = vweird.f32 %v733
      %vm757 = vweird.f32 %v751
      %vm758 = vmor %vm756, %vm757
      %v759 = vsel %vm758, %v751, %v755
      %v760 = vand.u32 2147483647, %v733
      %vm761 = vcmp.eq.f32.partialorder %v760, 8.507059e+37
      %v762 = vand.u32 %v733, 2147483648
      %v763 = vor.u32 1.1754944e-38, %v762
      %v764 = vsel %vm761, %v763, %v759
      %v765 = vmul.f32 1.0, %v764
      %v766 = vrcp.pop %v734
      %v767 = vmul.f32 %v734, %v766
      %v768 = vsub.f32 1.0, %v767
      %v769 = vmul.f32 %v766, %v768
      %v770 = vadd.f32 %v766, %v769
      %vm771 = vweird.f32 %v734
      %vm772 = vweird.f32 %v766
      %vm773 = vmor %vm771, %vm772
      %v774 = vsel %vm773, %v766, %v770
      %v775 = vand.u32 2147483647, %v734
      %vm776 = vcmp.eq.f32.partialorder %v775, 8.507059e+37
      %v777 = vand.u32 %v734, 2147483648
      %v778 = vor.u32 1.1754944e-38, %v777
      %v779 = vsel %vm776, %v778, %v774
      %v780 = vmul.f32 1.0, %v779
      %v781 = vrcp.pop %v735
      %v782 = vmul.f32 %v735, %v781
      %v783 = vsub.f32 1.0, %v782
      %v784 = vmul.f32 %v781, %v783
      %v785 = vadd.f32 %v781, %v784
      %vm786 = vweird.f32 %v735
      %vm787 = vweird.f32 %v781
      %vm788 = vmor %vm786, %vm787
      %v789 = vsel %vm788, %v781, %v785
      %v790 = vand.u32 2147483647, %v735
      %vm791 = vcmp.eq.f32.partialorder %v790, 8.507059e+37
      %v792 = vand.u32 %v735, 2147483648
      %v793 = vor.u32 1.1754944e-38, %v792
      %v794 = vsel %vm791, %v793, %v789
      %v795 = vmul.f32 1.0, %v794
      %v796 = vmul.f32 %v498, %v750
      %v797 = vmul.f32 %v518, %v765
      %v798 = vmul.f32 %v538, %v780
      %v799 = vmul.f32 %v558, %v795
      %v800 = vadd.f32 %v796, %v658
      %v801 = vadd.f32 %v797, %v678
      %v802 = vadd.f32 %v798, %v698
      %v803 = vadd.f32 %v799, %v718
      %v804 = vmax.f32 %v800, 0.0
      %v805 = vmax.f32 %v801, 0.0
      %v806 = vmax.f32 %v802, 0.0
      %v807 = vmax.f32 %v803, 0.0
      %v808 = vld [vmem:[%s4] sm:$0xff]
      %v809 = vld [vmem:[%s4 + $0x8] sm:$0xff]
      %v810 = vld [vmem:[%s4 + $0x10] sm:$0xff]
      %v811 = vld [vmem:[%s4 + $0x18] sm:$0xff]
      %v812 = vld [vmem:[%s4 + $0x20] sm:$0xff]
      %v813 = vld [vmem:[%s4 + $0x28] sm:$0xff]
      %v814 = vld [vmem:[%s4 + $0x30] sm:$0xff]
      %v815 = vld [vmem:[%s4 + $0x38] sm:$0xff]
      %v816 = vld [vmem:[%s4 + $0x40] sm:$0xff]
      %v817 = vld [vmem:[%s4 + $0x48] sm:$0xff]
      %v818 = vld [vmem:[%s4 + $0x50] sm:$0xff]
      %v819 = vld [vmem:[%s4 + $0x58] sm:$0xff]
      %v820 = vld [vmem:[%s4 + $0x60] sm:$0xff]
      %v821 = vld [vmem:[%s4 + $0x68] sm:$0xff]
      %v822 = vld [vmem:[%s4 + $0x70] sm:$0xff]
      %v823 = vld [vmem:[%s4 + $0x78] sm:$0xff]
      %v824 = vld [vmem:[%s4 + $0x80] sm:$0xff]
      %v825 = vld [vmem:[%s4 + $0x88] sm:$0xff]
      %v826 = vld [vmem:[%s4 + $0x90] sm:$0xff]
      %v827 = vld [vmem:[%s4 + $0x98] sm:$0xff]
      %v828 = vld [vmem:[%s4 + $0xa0] sm:$0xff]
      %v829 = vld [vmem:[%s4 + $0xa8] sm:$0xff]
      %v830 = vld [vmem:[%s4 + $0xb0] sm:$0xff]
      %v831 = vld [vmem:[%s4 + $0xb8] sm:$0xff]
      %v832 = vld [vmem:[%s4 + $0xc0] sm:$0xff]
      %v833 = vld [vmem:[%s4 + $0xc8] sm:$0xff]
      %v834 = vld [vmem:[%s4 + $0xd0] sm:$0xff]
      %v835 = vld [vmem:[%s4 + $0xd8] sm:$0xff]
      %v836 = vld [vmem:[%s4 + $0xe0] sm:$0xff]
      %v837 = vld [vmem:[%s4 + $0xe8] sm:$0xff]
      %v838 = vld [vmem:[%s4 + $0xf0] sm:$0xff]
      %v839 = vld [vmem:[%s4 + $0xf8] sm:$0xff]
      %v840 = vld [vmem:[%s4 + $0x100] sm:$0xff]
      %v841 = vld [vmem:[%s4 + $0x108] sm:$0xff]
      %v842 = vld [vmem:[%s4 + $0x110] sm:$0xff]
      %v843 = vld [vmem:[%s4 + $0x118] sm:$0xff]
      %v844 = vld [vmem:[%s4 + $0x120] sm:$0xff]
      %v845 = vld [vmem:[%s4 + $0x128] sm:$0xff]
      %v846 = vld [vmem:[%s4 + $0x130] sm:$0xff]
      %v847 = vld [vmem:[%s4 + $0x138] sm:$0xff]
      %v848 = vld [vmem:[%s4 + $0x140] sm:$0xff]
      %v849 = vld [vmem:[%s4 + $0x148] sm:$0xff]
      %v850 = vld [vmem:[%s4 + $0x150] sm:$0xff]
      %v851 = vld [vmem:[%s4 + $0x158] sm:$0xff]
      %v852 = vld [vmem:[%s4 + $0x160] sm:$0xff]
      %v853 = vld [vmem:[%s4 + $0x168] sm:$0xff]
      %v854 = vld [vmem:[%s4 + $0x170] sm:$0xff]
      %v855 = vld [vmem:[%s4 + $0x178] sm:$0xff]
      %v856 = vld [vmem:[%s4 + $0x180] sm:$0xff]
      %v857 = vld [vmem:[%s4 + $0x188] sm:$0xff]
      %v858 = vld [vmem:[%s4 + $0x190] sm:$0xff]
      %v859 = vld [vmem:[%s4 + $0x198] sm:$0xff]
      %v860 = vld [vmem:[%s4 + $0x1a0] sm:$0xff]
      %v861 = vld [vmem:[%s4 + $0x1a8] sm:$0xff]
      %v862 = vld [vmem:[%s4 + $0x1b0] sm:$0xff]
      %v863 = vld [vmem:[%s4 + $0x1b8] sm:$0xff]
      %v864 = vld [vmem:[%s4 + $0x1c0] sm:$0xff]
      %v865 = vld [vmem:[%s4 + $0x1c8] sm:$0xff]
      %v866 = vld [vmem:[%s4 + $0x1d0] sm:$0xff]
      %v867 = vld [vmem:[%s4 + $0x1d8] sm:$0xff]
      %v868 = vld [vmem:[%s4 + $0x1e0] sm:$0xff]
      %v869 = vld [vmem:[%s4 + $0x1e8] sm:$0xff]
      %v870 = vld [vmem:[%s4 + $0x1f0] sm:$0xff]
      %v871 = vld [vmem:[%s4 + $0x1f8] sm:$0xff]
      %v872 = vld [vmem:[%s4 + $0x200] sm:$0xff]
      %v873 = vld [vmem:[%s4 + $0x208] sm:$0xff]
      %v874 = vld [vmem:[%s4 + $0x210] sm:$0xff]
      %v875 = vld [vmem:[%s4 + $0x218] sm:$0xff]
      %v876 = vld [vmem:[%s4 + $0x220] sm:$0xff]
      %v877 = vld [vmem:[%s4 + $0x228] sm:$0xff]
      %v878 = vld [vmem:[%s4 + $0x230] sm:$0xff]
      %v879 = vld [vmem:[%s4 + $0x238] sm:$0xff]
      %v880 = vld [vmem:[%s4 + $0x240] sm:$0xff]
      %v881 = vld [vmem:[%s4 + $0x248] sm:$0xff]
      %v882 = vld [vmem:[%s4 + $0x250] sm:$0xff]
      %v883 = vld [vmem:[%s4 + $0x258] sm:$0xff]
      %v884 = vld [vmem:[%s4 + $0x260] sm:$0xff]
      %v885 = vld [vmem:[%s4 + $0x268] sm:$0xff]
      %v886 = vld [vmem:[%s4 + $0x270] sm:$0xff]
      %v887 = vld [vmem:[%s4 + $0x278] sm:$0xff]
      %v888 = vld [vmem:[%s4 + $0x280] sm:$0xff]
      %v889 = vld [vmem:[%s4 + $0x288] sm:$0xff]
      %v890 = vld [vmem:[%s4 + $0x290] sm:$0xff]
      %v891 = vld [vmem:[%s4 + $0x298] sm:$0xff]
      %v892 = vld [vmem:[%s4 + $0x2a0] sm:$0xff]
      %v893 = vld [vmem:[%s4 + $0x2a8] sm:$0xff]
      %v894 = vld [vmem:[%s4 + $0x2b0] sm:$0xff]
      %v895 = vld [vmem:[%s4 + $0x2b8] sm:$0xff]
      %v896 = vld [vmem:[%s4 + $0x2c0] sm:$0xff]
      %v897 = vld [vmem:[%s4 + $0x2c8] sm:$0xff]
      %v898 = vld [vmem:[%s4 + $0x2d0] sm:$0xff]
      %v899 = vld [vmem:[%s4 + $0x2d8] sm:$0xff]
      %v900 = vld [vmem:[%s4 + $0x2e0] sm:$0xff]
      %v901 = vld [vmem:[%s4 + $0x2e8] sm:$0xff]
      %v902 = vld [vmem:[%s4 + $0x2f0] sm:$0xff]
      %v903 = vld [vmem:[%s4 + $0x2f8] sm:$0xff]
      %v904 = vld [vmem:[%s4 + $0x300] sm:$0xff]
      %v905 = vld [vmem:[%s4 + $0x308] sm:$0xff]
      %v906 = vld [vmem:[%s4 + $0x310] sm:$0xff]
      %v907 = vld [vmem:[%s4 + $0x318] sm:$0xff]
      %v908 = vld [vmem:[%s4 + $0x320] sm:$0xff]
      %v909 = vld [vmem:[%s4 + $0x328] sm:$0xff]
      %v910 = vld [vmem:[%s4 + $0x330] sm:$0xff]
      %v911 = vld [vmem:[%s4 + $0x338] sm:$0xff]
      %v912 = vld [vmem:[%s4 + $0x340] sm:$0xff]
      %v913 = vld [vmem:[%s4 + $0x348] sm:$0xff]
      %v914 = vld [vmem:[%s4 + $0x350] sm:$0xff]
      %v915 = vld [vmem:[%s4 + $0x358] sm:$0xff]
      %v916 = vld [vmem:[%s4 + $0x360] sm:$0xff]
      %v917 = vld [vmem:[%s4 + $0x368] sm:$0xff]
      %v918 = vld [vmem:[%s4 + $0x370] sm:$0xff]
      %v919 = vld [vmem:[%s4 + $0x378] sm:$0xff]
      %v920 = vld [vmem:[%s4 + $0x380] sm:$0xff]
      %v921 = vld [vmem:[%s4 + $0x388] sm:$0xff]
      %v922 = vld [vmem:[%s4 + $0x390] sm:$0xff]
      %v923 = vld [vmem:[%s4 + $0x398] sm:$0xff]
      %v924 = vld [vmem:[%s4 + $0x3a0] sm:$0xff]
      %v925 = vld [vmem:[%s4 + $0x3a8] sm:$0xff]
      %v926 = vld [vmem:[%s4 + $0x3b0] sm:$0xff]
      %v927 = vld [vmem:[%s4 + $0x3b8] sm:$0xff]
      %v928 = vld [vmem:[%s4 + $0x3c0] sm:$0xff]
      %v929 = vld [vmem:[%s4 + $0x3c8] sm:$0xff]
      %v930 = vld [vmem:[%s4 + $0x3d0] sm:$0xff]
      %v931 = vld [vmem:[%s4 + $0x3d8] sm:$0xff]
      %v932 = vld [vmem:[%s4 + $0x3e0] sm:$0xff]
      %v933 = vld [vmem:[%s4 + $0x3e8] sm:$0xff]
      %v934 = vld [vmem:[%s4 + $0x3f0] sm:$0xff]
      %v935 = vld [vmem:[%s4 + $0x3f8] sm:$0xff]
      %936 = vmatpush.msra.mxu0 %v838
      %937 = vmatpush.msra.mxu0 %v836
      %938 = vmatpush.msra.mxu0 %v834
      %939 = vmatpush.msra.mxu0 %v832
      %940 = vmatpush.msra.mxu0 %v830
      %941 = vmatpush.msra.mxu0 %v828
      %942 = vmatpush.msra.mxu0 %v826
      %943 = vmatpush.msra.mxu0 %v824
      %944 = vmatpush.msra.mxu0 %v822
      %945 = vmatpush.msra.mxu0 %v820
      %946 = vmatpush.msra.mxu0 %v818
      %947 = vmatpush.msra.mxu0 %v816
      %948 = vmatpush.msra.mxu0 %v814
      %949 = vmatpush.msra.mxu0 %v812
      %950 = vmatpush.msra.mxu0 %v810
      %951 = vmatpush.msra.mxu0 %v808
      %952 = vmatmul.f32.gmra.mxu0 %v804
      %v953 = vpop.f32.mrf.mxu0
      %v954 = vadd.f32 0.0, %v953
      %955 = vdwg.mxu0
      %956 = vmatpush.msra.mxu0 %v870
      %957 = vmatpush.msra.mxu0 %v868
      %958 = vmatpush.msra.mxu0 %v866
      %959 = vmatpush.msra.mxu0 %v864
      %960 = vmatpush.msra.mxu0 %v862
      %961 = vmatpush.msra.mxu0 %v860
      %962 = vmatpush.msra.mxu0 %v858
      %963 = vmatpush.msra.mxu0 %v856
      %964 = vmatpush.msra.mxu0 %v854
      %965 = vmatpush.msra.mxu0 %v852
      %966 = vmatpush.msra.mxu0 %v850
      %967 = vmatpush.msra.mxu0 %v848
      %968 = vmatpush.msra.mxu0 %v846
      %969 = vmatpush.msra.mxu0 %v844
      %970 = vmatpush.msra.mxu0 %v842
      %971 = vmatpush.msra.mxu0 %v840
      %972 = vmatmul.f32.gmra.mxu0 %v805
      %v973 = vpop.f32.mrf.mxu0
      %v974 = vadd.f32 %v954, %v973
      %975 = vdwg.mxu0
      %976 = vmatpush.msra.mxu0 %v902
      %977 = vmatpush.msra.mxu0 %v900
      %978 = vmatpush.msra.mxu0 %v898
      %979 = vmatpush.msra.mxu0 %v896
      %980 = vmatpush.msra.mxu0 %v894
      %981 = vmatpush.msra.mxu0 %v892
      %982 = vmatpush.msra.mxu0 %v890
      %983 = vmatpush.msra.mxu0 %v888
      %984 = vmatpush.msra.mxu0 %v886
      %985 = vmatpush.msra.mxu0 %v884
      %986 = vmatpush.msra.mxu0 %v882
      %987 = vmatpush.msra.mxu0 %v880
      %988 = vmatpush.msra.mxu0 %v878
      %989 = vmatpush.msra.mxu0 %v876
      %990 = vmatpush.msra.mxu0 %v874
      %991 = vmatpush.msra.mxu0 %v872
      %992 = vmatmul.f32.gmra.mxu0 %v806
      %v993 = vpop.f32.mrf.mxu0
      %v994 = vadd.f32 %v974, %v993
      %995 = vdwg.mxu0
      %996 = vmatpush.msra.mxu0 %v934
      %997 = vmatpush.msra.mxu0 %v932
      %998 = vmatpush.msra.mxu0 %v930
      %999 = vmatpush.msra.mxu0 %v928
      %1000 = vmatpush.msra.mxu0 %v926
      %1001 = vmatpush.msra.mxu0 %v924
      %1002 = vmatpush.msra.mxu0 %v922
      %1003 = vmatpush.msra.mxu0 %v920
      %1004 = vmatpush.msra.mxu0 %v918
      %1005 = vmatpush.msra.mxu0 %v916
      %1006 = vmatpush.msra.mxu0 %v914
      %1007 = vmatpush.msra.mxu0 %v912
      %1008 = vmatpush.msra.mxu0 %v910
      %1009 = vmatpush.msra.mxu0 %v908
      %1010 = vmatpush.msra.mxu0 %v906
      %1011 = vmatpush.msra.mxu0 %v904
      %1012 = vmatmul.f32.gmra.mxu0 %v807
      %v1013 = vpop.f32.mrf.mxu0
      %v1014 = vadd.f32 %v994, %v1013
      %1015 = vdwg.mxu0
      %1016 = vmatpush.msra.mxu0 %v839
      %1017 = vmatpush.msra.mxu0 %v837
      %1018 = vmatpush.msra.mxu0 %v835
      %1019 = vmatpush.msra.mxu0 %v833
      %1020 = vmatpush.msra.mxu0 %v831
      %1021 = vmatpush.msra.mxu0 %v829
      %1022 = vmatpush.msra.mxu0 %v827
      %1023 = vmatpush.msra.mxu0 %v825
      %1024 = vmatpush.msra.mxu0 %v823
      %1025 = vmatpush.msra.mxu0 %v821
      %1026 = vmatpush.msra.mxu0 %v819
      %1027 = vmatpush.msra.mxu0 %v817
      %1028 = vmatpush.msra.mxu0 %v815
      %1029 = vmatpush.msra.mxu0 %v813
      %1030 = vmatpush.msra.mxu0 %v811
      %1031 = vmatpush.msra.mxu0 %v809
      %1032 = vmatmul.f32.gmra.mxu0 %v804
      %v1033 = vpop.f32.mrf.mxu0
      %v1034 = vadd.f32 0.0, %v1033
      %1035 = vdwg.mxu0
      %1036 = vmatpush.msra.mxu0 %v871
      %1037 = vmatpush.msra.mxu0 %v869
      %1038 = vmatpush.msra.mxu0 %v867
      %1039 = vmatpush.msra.mxu0 %v865
      %1040 = vmatpush.msra.mxu0 %v863
      %1041 = vmatpush.msra.mxu0 %v861
      %1042 = vmatpush.msra.mxu0 %v859
      %1043 = vmatpush.msra.mxu0 %v857
      %1044 = vmatpush.msra.mxu0 %v855
      %1045 = vmatpush.msra.mxu0 %v853
      %1046 = vmatpush.msra.mxu0 %v851
      %1047 = vmatpush.msra.mxu0 %v849
      %1048 = vmatpush.msra.mxu0 %v847
      %1049 = vmatpush.msra.mxu0 %v845
      %1050 = vmatpush.msra.mxu0 %v843
      %1051 = vmatpush.msra.mxu0 %v841
      %1052 = vmatmul.f32.gmra.mxu0 %v805
      %v1053 = vpop.f32.mrf.mxu0
      %v1054 = vadd.f32 %v1034, %v1053
      %1055 = vdwg.mxu0
      %1056 = vmatpush.msra.mxu0 %v903
      %1057 = vmatpush.msra.mxu0 %v901
      %1058 = vmatpush.msra.mxu0 %v899
      %1059 = vmatpush.msra.mxu0 %v897
      %1060 = vmatpush.msra.mxu0 %v895
      %1061 = vmatpush.msra.mxu0 %v893
      %1062 = vmatpush.msra.mxu0 %v891
      %1063 = vmatpush.msra.mxu0 %v889
      %1064 = vmatpush.msra.mxu0 %v887
      %1065 = vmatpush.msra.mxu0 %v885
      %1066 = vmatpush.msra.mxu0 %v883
      %1067 = vmatpush.msra.mxu0 %v881
      %1068 = vmatpush.msra.mxu0 %v879
      %1069 = vmatpush.msra.mxu0 %v877
      %1070 = vmatpush.msra.mxu0 %v875
      %1071 = vmatpush.msra.mxu0 %v873
      %1072 = vmatmul.f32.gmra.mxu0 %v806
      %v1073 = vpop.f32.mrf.mxu0
      %v1074 = vadd.f32 %v1054, %v1073
      %1075 = vdwg.mxu0
      %1076 = vmatpush.msra.mxu0 %v935
      %1077 = vmatpush.msra.mxu0 %v933
      %1078 = vmatpush.msra.mxu0 %v931
      %1079 = vmatpush.msra.mxu0 %v929
      %1080 = vmatpush.msra.mxu0 %v927
      %1081 = vmatpush.msra.mxu0 %v925
      %1082 = vmatpush.msra.mxu0 %v923
      %1083 = vmatpush.msra.mxu0 %v921
      %1084 = vmatpush.msra.mxu0 %v919
      %1085 = vmatpush.msra.mxu0 %v917
      %1086 = vmatpush.msra.mxu0 %v915
      %1087 = vmatpush.msra.mxu0 %v913
      %1088 = vmatpush.msra.mxu0 %v911
      %1089 = vmatpush.msra.mxu0 %v909
      %1090 = vmatpush.msra.mxu0 %v907
      %1091 = vmatpush.msra.mxu0 %v905
      %1092 = vmatmul.f32.gmra.mxu0 %v807
      %v1093 = vpop.f32.mrf.mxu0
      %v1094 = vadd.f32 %v1074, %v1093
      %1095 = vdwg.mxu0
      %v1096 = vld [vmem:[%s1] sm:$0xff]
      %vm1097 = vcmask 64512
      %v1099 = vsel %vm1097, %v1096, 0
      %1101 = vmatpush.msra.mxu0 0.0
      %1102 = vmatpush.msra.mxu0 0.0
      %1103 = vmatpush.msra.mxu0 0.0
      %1104 = vmatpush.msra.mxu0 0.0
      %1105 = vmatpush.msra.mxu0 0.0
      %1106 = vmatpush.msra.mxu0 0.0
      %1107 = vmatpush.msra.mxu0 0.0
      %1108 = vmatpush.msra.mxu0 0.0
      %1109 = vmatpush.msra.mxu0 0.0
      %1110 = vmatpush.msra.mxu0 0.0
      %1111 = vmatpush.msra.mxu0 0.0
      %1112 = vmatpush.msra.mxu0 0.0
      %1113 = vmatpush.msra.mxu0 0.0
      %1114 = vmatpush.msra.mxu0 0.0
      %1115 = vmatpush.msra.mxu0 0.0
      %1116 = vmatpush.msra.mxu0 %v1014
      %1117 = vmatmul.f32.gmra.mxu0 %v1099
      %v1118 = vpop.f32.mrf.mxu0
      %v1119 = vadd.f32 0.0, %v1118
      %1120 = vdwg.mxu0
      %1121 = vmatpush.msra.mxu0 0.0
      %1122 = vmatpush.msra.mxu0 0.0
      %1123 = vmatpush.msra.mxu0 0.0
      %1124 = vmatpush.msra.mxu0 0.0
      %1125 = vmatpush.msra.mxu0 0.0
      %1126 = vmatpush.msra.mxu0 0.0
      %1127 = vmatpush.msra.mxu0 0.0
      %1128 = vmatpush.msra.mxu0 0.0
      %1129 = vmatpush.msra.mxu0 0.0
      %1130 = vmatpush.msra.mxu0 0.0
      %1131 = vmatpush.msra.mxu0 0.0
      %1132 = vmatpush.msra.mxu0 0.0
      %1133 = vmatpush.msra.mxu0 0.0
      %1134 = vmatpush.msra.mxu0 0.0
      %1135 = vmatpush.msra.mxu0 0.0
      %1136 = vmatpush.msra.mxu0 %v1094
      %1137 = vmatmul.f32.gmra.mxu0 %v1099
      %v1138 = vpop.f32.mrf.mxu0
      %v1139 = vadd.f32 0.0, %v1138
      %1140 = vdwg.mxu0
      %v1141 = vmax.f32 %v1119, 0.0
      %v1142 = vmax.f32 %v1139, 0.0
      %v1143 = vld [vmem:[%s5] sm:$0xff]
      %v1144 = vld [vmem:[%s5 + $0x8] sm:$0xff]
      %v1145 = vld [vmem:[%s5 + $0x10] sm:$0xff]
      %v1146 = vld [vmem:[%s5 + $0x18] sm:$0xff]
      %v1147 = vld [vmem:[%s5 + $0x20] sm:$0xff]
      %v1148 = vld [vmem:[%s5 + $0x28] sm:$0xff]
      %v1149 = vld [vmem:[%s5 + $0x30] sm:$0xff]
      %v1150 = vld [vmem:[%s5 + $0x38] sm:$0xff]
      %v1151 = vld [vmem:[%s5 + $0x40] sm:$0xff]
      %v1152 = vld [vmem:[%s5 + $0x48] sm:$0xff]
      %v1153 = vld [vmem:[%s5 + $0x50] sm:$0xff]
      %v1154 = vld [vmem:[%s5 + $0x58] sm:$0xff]
      %v1155 = vld [vmem:[%s5 + $0x60] sm:$0xff]
      %v1156 = vld [vmem:[%s5 + $0x68] sm:$0xff]
      %v1157 = vld [vmem:[%s5 + $0x70] sm:$0xff]
      %v1158 = vld [vmem:[%s5 + $0x78] sm:$0xff]
      %v1159 = vld [vmem:[%s5 + $0x80] sm:$0xff]
      %v1160 = vld [vmem:[%s5 + $0x88] sm:$0xff]
      %v1161 = vld [vmem:[%s5 + $0x90] sm:$0xff]
      %v1162 = vld [vmem:[%s5 + $0x98] sm:$0xff]
      %v1163 = vld [vmem:[%s5 + $0xa0] sm:$0xff]
      %v1164 = vld [vmem:[%s5 + $0xa8] sm:$0xff]
      %v1165 = vld [vmem:[%s5 + $0xb0] sm:$0xff]
      %v1166 = vld [vmem:[%s5 + $0xb8] sm:$0xff]
      %v1167 = vld [vmem:[%s5 + $0xc0] sm:$0xff]
      %v1168 = vld [vmem:[%s5 + $0xc8] sm:$0xff]
      %v1169 = vld [vmem:[%s5 + $0xd0] sm:$0xff]
      %v1170 = vld [vmem:[%s5 + $0xd8] sm:$0xff]
      %v1171 = vld [vmem:[%s5 + $0xe0] sm:$0xff]
      %v1172 = vld [vmem:[%s5 + $0xe8] sm:$0xff]
      %v1173 = vld [vmem:[%s5 + $0xf0] sm:$0xff]
      %v1174 = vld [vmem:[%s5 + $0xf8] sm:$0xff]
      %v1175 = vld [vmem:[%s5 + $0x100] sm:$0xff]
      %v1176 = vld [vmem:[%s5 + $0x108] sm:$0xff]
      %v1177 = vld [vmem:[%s5 + $0x110] sm:$0xff]
      %v1178 = vld [vmem:[%s5 + $0x118] sm:$0xff]
      %v1179 = vld [vmem:[%s5 + $0x120] sm:$0xff]
      %v1180 = vld [vmem:[%s5 + $0x128] sm:$0xff]
      %v1181 = vld [vmem:[%s5 + $0x130] sm:$0xff]
      %v1182 = vld [vmem:[%s5 + $0x138] sm:$0xff]
      %v1183 = vld [vmem:[%s5 + $0x140] sm:$0xff]
      %v1184 = vld [vmem:[%s5 + $0x148] sm:$0xff]
      %v1185 = vld [vmem:[%s5 + $0x150] sm:$0xff]
      %v1186 = vld [vmem:[%s5 + $0x158] sm:$0xff]
      %v1187 = vld [vmem:[%s5 + $0x160] sm:$0xff]
      %v1188 = vld [vmem:[%s5 + $0x168] sm:$0xff]
      %v1189 = vld [vmem:[%s5 + $0x170] sm:$0xff]
      %v1190 = vld [vmem:[%s5 + $0x178] sm:$0xff]
      %v1191 = vld [vmem:[%s5 + $0x180] sm:$0xff]
      %v1192 = vld [vmem:[%s5 + $0x188] sm:$0xff]
      %v1193 = vld [vmem:[%s5 + $0x190] sm:$0xff]
      %v1194 = vld [vmem:[%s5 + $0x198] sm:$0xff]
      %v1195 = vld [vmem:[%s5 + $0x1a0] sm:$0xff]
      %v1196 = vld [vmem:[%s5 + $0x1a8] sm:$0xff]
      %v1197 = vld [vmem:[%s5 + $0x1b0] sm:$0xff]
      %v1198 = vld [vmem:[%s5 + $0x1b8] sm:$0xff]
      %v1199 = vld [vmem:[%s5 + $0x1c0] sm:$0xff]
      %v1200 = vld [vmem:[%s5 + $0x1c8] sm:$0xff]
      %v1201 = vld [vmem:[%s5 + $0x1d0] sm:$0xff]
      %v1202 = vld [vmem:[%s5 + $0x1d8] sm:$0xff]
      %v1203 = vld [vmem:[%s5 + $0x1e0] sm:$0xff]
      %v1204 = vld [vmem:[%s5 + $0x1e8] sm:$0xff]
      %v1205 = vld [vmem:[%s5 + $0x1f0] sm:$0xff]
      %v1206 = vld [vmem:[%s5 + $0x1f8] sm:$0xff]
      %v1207 = vld [vmem:[%s5 + $0x200] sm:$0xff]
      %v1208 = vld [vmem:[%s5 + $0x208] sm:$0xff]
      %v1209 = vld [vmem:[%s5 + $0x210] sm:$0xff]
      %v1210 = vld [vmem:[%s5 + $0x218] sm:$0xff]
      %v1211 = vld [vmem:[%s5 + $0x220] sm:$0xff]
      %v1212 = vld [vmem:[%s5 + $0x228] sm:$0xff]
      %v1213 = vld [vmem:[%s5 + $0x230] sm:$0xff]
      %v1214 = vld [vmem:[%s5 + $0x238] sm:$0xff]
      %v1215 = vld [vmem:[%s5 + $0x240] sm:$0xff]
      %v1216 = vld [vmem:[%s5 + $0x248] sm:$0xff]
      %v1217 = vld [vmem:[%s5 + $0x250] sm:$0xff]
      %v1218 = vld [vmem:[%s5 + $0x258] sm:$0xff]
      %v1219 = vld [vmem:[%s5 + $0x260] sm:$0xff]
      %v1220 = vld [vmem:[%s5 + $0x268] sm:$0xff]
      %v1221 = vld [vmem:[%s5 + $0x270] sm:$0xff]
      %v1222 = vld [vmem:[%s5 + $0x278] sm:$0xff]
      %v1223 = vld [vmem:[%s5 + $0x280] sm:$0xff]
      %v1224 = vld [vmem:[%s5 + $0x288] sm:$0xff]
      %v1225 = vld [vmem:[%s5 + $0x290] sm:$0xff]
      %v1226 = vld [vmem:[%s5 + $0x298] sm:$0xff]
      %v1227 = vld [vmem:[%s5 + $0x2a0] sm:$0xff]
      %v1228 = vld [vmem:[%s5 + $0x2a8] sm:$0xff]
      %v1229 = vld [vmem:[%s5 + $0x2b0] sm:$0xff]
      %v1230 = vld [vmem:[%s5 + $0x2b8] sm:$0xff]
      %v1231 = vld [vmem:[%s5 + $0x2c0] sm:$0xff]
      %v1232 = vld [vmem:[%s5 + $0x2c8] sm:$0xff]
      %v1233 = vld [vmem:[%s5 + $0x2d0] sm:$0xff]
      %v1234 = vld [vmem:[%s5 + $0x2d8] sm:$0xff]
      %v1235 = vld [vmem:[%s5 + $0x2e0] sm:$0xff]
      %v1236 = vld [vmem:[%s5 + $0x2e8] sm:$0xff]
      %v1237 = vld [vmem:[%s5 + $0x2f0] sm:$0xff]
      %v1238 = vld [vmem:[%s5 + $0x2f8] sm:$0xff]
      %v1239 = vld [vmem:[%s5 + $0x300] sm:$0xff]
      %v1240 = vld [vmem:[%s5 + $0x308] sm:$0xff]
      %v1241 = vld [vmem:[%s5 + $0x310] sm:$0xff]
      %v1242 = vld [vmem:[%s5 + $0x318] sm:$0xff]
      %v1243 = vld [vmem:[%s5 + $0x320] sm:$0xff]
      %v1244 = vld [vmem:[%s5 + $0x328] sm:$0xff]
      %v1245 = vld [vmem:[%s5 + $0x330] sm:$0xff]
      %v1246 = vld [vmem:[%s5 + $0x338] sm:$0xff]
      %v1247 = vld [vmem:[%s5 + $0x340] sm:$0xff]
      %v1248 = vld [vmem:[%s5 + $0x348] sm:$0xff]
      %v1249 = vld [vmem:[%s5 + $0x350] sm:$0xff]
      %v1250 = vld [vmem:[%s5 + $0x358] sm:$0xff]
      %v1251 = vld [vmem:[%s5 + $0x360] sm:$0xff]
      %v1252 = vld [vmem:[%s5 + $0x368] sm:$0xff]
      %v1253 = vld [vmem:[%s5 + $0x370] sm:$0xff]
      %v1254 = vld [vmem:[%s5 + $0x378] sm:$0xff]
      %v1255 = vld [vmem:[%s5 + $0x380] sm:$0xff]
      %v1256 = vld [vmem:[%s5 + $0x388] sm:$0xff]
      %v1257 = vld [vmem:[%s5 + $0x390] sm:$0xff]
      %v1258 = vld [vmem:[%s5 + $0x398] sm:$0xff]
      %v1259 = vld [vmem:[%s5 + $0x3a0] sm:$0xff]
      %v1260 = vld [vmem:[%s5 + $0x3a8] sm:$0xff]
      %v1261 = vld [vmem:[%s5 + $0x3b0] sm:$0xff]
      %v1262 = vld [vmem:[%s5 + $0x3b8] sm:$0xff]
      %v1263 = vld [vmem:[%s5 + $0x3c0] sm:$0xff]
      %v1264 = vld [vmem:[%s5 + $0x3c8] sm:$0xff]
      %v1265 = vld [vmem:[%s5 + $0x3d0] sm:$0xff]
      %v1266 = vld [vmem:[%s5 + $0x3d8] sm:$0xff]
      %v1267 = vld [vmem:[%s5 + $0x3e0] sm:$0xff]
      %v1268 = vld [vmem:[%s5 + $0x3e8] sm:$0xff]
      %v1269 = vld [vmem:[%s5 + $0x3f0] sm:$0xff]
      %v1270 = vld [vmem:[%s5 + $0x3f8] sm:$0xff]
      %v1271 = vld [vmem:[%s5 + $0x400] sm:$0xff]
      %v1272 = vld [vmem:[%s5 + $0x408] sm:$0xff]
      %v1273 = vld [vmem:[%s5 + $0x410] sm:$0xff]
      %v1274 = vld [vmem:[%s5 + $0x418] sm:$0xff]
      %v1275 = vld [vmem:[%s5 + $0x420] sm:$0xff]
      %v1276 = vld [vmem:[%s5 + $0x428] sm:$0xff]
      %v1277 = vld [vmem:[%s5 + $0x430] sm:$0xff]
      %v1278 = vld [vmem:[%s5 + $0x438] sm:$0xff]
      %v1279 = vld [vmem:[%s5 + $0x440] sm:$0xff]
      %v1280 = vld [vmem:[%s5 + $0x448] sm:$0xff]
      %v1281 = vld [vmem:[%s5 + $0x450] sm:$0xff]
      %v1282 = vld [vmem:[%s5 + $0x458] sm:$0xff]
      %v1283 = vld [vmem:[%s5 + $0x460] sm:$0xff]
      %v1284 = vld [vmem:[%s5 + $0x468] sm:$0xff]
      %v1285 = vld [vmem:[%s5 + $0x470] sm:$0xff]
      %v1286 = vld [vmem:[%s5 + $0x478] sm:$0xff]
      %v1287 = vld [vmem:[%s5 + $0x480] sm:$0xff]
      %v1288 = vld [vmem:[%s5 + $0x488] sm:$0xff]
      %v1289 = vld [vmem:[%s5 + $0x490] sm:$0xff]
      %v1290 = vld [vmem:[%s5 + $0x498] sm:$0xff]
      %v1291 = vld [vmem:[%s5 + $0x4a0] sm:$0xff]
      %v1292 = vld [vmem:[%s5 + $0x4a8] sm:$0xff]
      %v1293 = vld [vmem:[%s5 + $0x4b0] sm:$0xff]
      %v1294 = vld [vmem:[%s5 + $0x4b8] sm:$0xff]
      %v1295 = vld [vmem:[%s5 + $0x4c0] sm:$0xff]
      %v1296 = vld [vmem:[%s5 + $0x4c8] sm:$0xff]
      %v1297 = vld [vmem:[%s5 + $0x4d0] sm:$0xff]
      %v1298 = vld [vmem:[%s5 + $0x4d8] sm:$0xff]
      %v1299 = vld [vmem:[%s5 + $0x4e0] sm:$0xff]
      %v1300 = vld [vmem:[%s5 + $0x4e8] sm:$0xff]
      %v1301 = vld [vmem:[%s5 + $0x4f0] sm:$0xff]
      %v1302 = vld [vmem:[%s5 + $0x4f8] sm:$0xff]
      %v1303 = vld [vmem:[%s5 + $0x500] sm:$0xff]
      %v1304 = vld [vmem:[%s5 + $0x508] sm:$0xff]
      %v1305 = vld [vmem:[%s5 + $0x510] sm:$0xff]
      %v1306 = vld [vmem:[%s5 + $0x518] sm:$0xff]
      %v1307 = vld [vmem:[%s5 + $0x520] sm:$0xff]
      %v1308 = vld [vmem:[%s5 + $0x528] sm:$0xff]
      %v1309 = vld [vmem:[%s5 + $0x530] sm:$0xff]
      %v1310 = vld [vmem:[%s5 + $0x538] sm:$0xff]
      %v1311 = vld [vmem:[%s5 + $0x540] sm:$0xff]
      %v1312 = vld [vmem:[%s5 + $0x548] sm:$0xff]
      %v1313 = vld [vmem:[%s5 + $0x550] sm:$0xff]
      %v1314 = vld [vmem:[%s5 + $0x558] sm:$0xff]
      %v1315 = vld [vmem:[%s5 + $0x560] sm:$0xff]
      %v1316 = vld [vmem:[%s5 + $0x568] sm:$0xff]
      %v1317 = vld [vmem:[%s5 + $0x570] sm:$0xff]
      %v1318 = vld [vmem:[%s5 + $0x578] sm:$0xff]
      %v1319 = vld [vmem:[%s5 + $0x580] sm:$0xff]
      %v1320 = vld [vmem:[%s5 + $0x588] sm:$0xff]
      %v1321 = vld [vmem:[%s5 + $0x590] sm:$0xff]
      %v1322 = vld [vmem:[%s5 + $0x598] sm:$0xff]
      %v1323 = vld [vmem:[%s5 + $0x5a0] sm:$0xff]
      %v1324 = vld [vmem:[%s5 + $0x5a8] sm:$0xff]
      %v1325 = vld [vmem:[%s5 + $0x5b0] sm:$0xff]
      %v1326 = vld [vmem:[%s5 + $0x5b8] sm:$0xff]
      %v1327 = vld [vmem:[%s5 + $0x5c0] sm:$0xff]
      %v1328 = vld [vmem:[%s5 + $0x5c8] sm:$0xff]
      %v1329 = vld [vmem:[%s5 + $0x5d0] sm:$0xff]
      %v1330 = vld [vmem:[%s5 + $0x5d8] sm:$0xff]
      %v1331 = vld [vmem:[%s5 + $0x5e0] sm:$0xff]
      %v1332 = vld [vmem:[%s5 + $0x5e8] sm:$0xff]
      %v1333 = vld [vmem:[%s5 + $0x5f0] sm:$0xff]
      %v1334 = vld [vmem:[%s5 + $0x5f8] sm:$0xff]
      %v1335 = vld [vmem:[%s5 + $0x600] sm:$0xff]
      %v1336 = vld [vmem:[%s5 + $0x608] sm:$0xff]
      %v1337 = vld [vmem:[%s5 + $0x610] sm:$0xff]
      %v1338 = vld [vmem:[%s5 + $0x618] sm:$0xff]
      %v1339 = vld [vmem:[%s5 + $0x620] sm:$0xff]
      %v1340 = vld [vmem:[%s5 + $0x628] sm:$0xff]
      %v1341 = vld [vmem:[%s5 + $0x630] sm:$0xff]
      %v1342 = vld [vmem:[%s5 + $0x638] sm:$0xff]
      %v1343 = vld [vmem:[%s5 + $0x640] sm:$0xff]
      %v1344 = vld [vmem:[%s5 + $0x648] sm:$0xff]
      %v1345 = vld [vmem:[%s5 + $0x650] sm:$0xff]
      %v1346 = vld [vmem:[%s5 + $0x658] sm:$0xff]
      %v1347 = vld [vmem:[%s5 + $0x660] sm:$0xff]
      %v1348 = vld [vmem:[%s5 + $0x668] sm:$0xff]
      %v1349 = vld [vmem:[%s5 + $0x670] sm:$0xff]
      %v1350 = vld [vmem:[%s5 + $0x678] sm:$0xff]
      %v1351 = vld [vmem:[%s5 + $0x680] sm:$0xff]
      %v1352 = vld [vmem:[%s5 + $0x688] sm:$0xff]
      %v1353 = vld [vmem:[%s5 + $0x690] sm:$0xff]
      %v1354 = vld [vmem:[%s5 + $0x698] sm:$0xff]
      %v1355 = vld [vmem:[%s5 + $0x6a0] sm:$0xff]
      %v1356 = vld [vmem:[%s5 + $0x6a8] sm:$0xff]
      %v1357 = vld [vmem:[%s5 + $0x6b0] sm:$0xff]
      %v1358 = vld [vmem:[%s5 + $0x6b8] sm:$0xff]
      %v1359 = vld [vmem:[%s5 + $0x6c0] sm:$0xff]
      %v1360 = vld [vmem:[%s5 + $0x6c8] sm:$0xff]
      %v1361 = vld [vmem:[%s5 + $0x6d0] sm:$0xff]
      %v1362 = vld [vmem:[%s5 + $0x6d8] sm:$0xff]
      %v1363 = vld [vmem:[%s5 + $0x6e0] sm:$0xff]
      %v1364 = vld [vmem:[%s5 + $0x6e8] sm:$0xff]
      %v1365 = vld [vmem:[%s5 + $0x6f0] sm:$0xff]
      %v1366 = vld [vmem:[%s5 + $0x6f8] sm:$0xff]
      %v1367 = vld [vmem:[%s5 + $0x700] sm:$0xff]
      %v1368 = vld [vmem:[%s5 + $0x708] sm:$0xff]
      %v1369 = vld [vmem:[%s5 + $0x710] sm:$0xff]
      %v1370 = vld [vmem:[%s5 + $0x718] sm:$0xff]
      %v1371 = vld [vmem:[%s5 + $0x720] sm:$0xff]
      %v1372 = vld [vmem:[%s5 + $0x728] sm:$0xff]
      %v1373 = vld [vmem:[%s5 + $0x730] sm:$0xff]
      %v1374 = vld [vmem:[%s5 + $0x738] sm:$0xff]
      %v1375 = vld [vmem:[%s5 + $0x740] sm:$0xff]
      %v1376 = vld [vmem:[%s5 + $0x748] sm:$0xff]
      %v1377 = vld [vmem:[%s5 + $0x750] sm:$0xff]
      %v1378 = vld [vmem:[%s5 + $0x758] sm:$0xff]
      %v1379 = vld [vmem:[%s5 + $0x760] sm:$0xff]
      %v1380 = vld [vmem:[%s5 + $0x768] sm:$0xff]
      %v1381 = vld [vmem:[%s5 + $0x770] sm:$0xff]
      %v1382 = vld [vmem:[%s5 + $0x778] sm:$0xff]
      %v1383 = vld [vmem:[%s5 + $0x780] sm:$0xff]
      %v1384 = vld [vmem:[%s5 + $0x788] sm:$0xff]
      %v1385 = vld [vmem:[%s5 + $0x790] sm:$0xff]
      %v1386 = vld [vmem:[%s5 + $0x798] sm:$0xff]
      %v1387 = vld [vmem:[%s5 + $0x7a0] sm:$0xff]
      %v1388 = vld [vmem:[%s5 + $0x7a8] sm:$0xff]
      %v1389 = vld [vmem:[%s5 + $0x7b0] sm:$0xff]
      %v1390 = vld [vmem:[%s5 + $0x7b8] sm:$0xff]
      %v1391 = vld [vmem:[%s5 + $0x7c0] sm:$0xff]
      %v1392 = vld [vmem:[%s5 + $0x7c8] sm:$0xff]
      %v1393 = vld [vmem:[%s5 + $0x7d0] sm:$0xff]
      %v1394 = vld [vmem:[%s5 + $0x7d8] sm:$0xff]
      %v1395 = vld [vmem:[%s6] sm:$0xff]
      %v1396 = vld [vmem:[%s6 + $0x8] sm:$0x1]
      %v1399 = vperm.slane %v1395, 0
      %v1400 = vperm.slane %v1395, 1
      %v1401 = vperm.slane %v1395, 2
      %v1402 = vperm.slane %v1395, 3
      %v1403 = vperm.slane %v1395, 4
      %v1404 = vperm.slane %v1395, 5
      %v1405 = vperm.slane %v1395, 6
      %v1406 = vperm.slane %v1395, 7
      %v1407 = vperm.slane %v1396, 0
      %vm1417 = vcmask 785408
      %v1419 = vsel %vm1417, %v1142, 0
      %1421 = vmatpush.msra.mxu0 %v1278
      %1422 = vmatpush.msra.mxu0 %v1269
      %1423 = vmatpush.msra.mxu0 %v1260
      %1424 = vmatpush.msra.mxu0 %v1251
      %1425 = vmatpush.msra.mxu0 %v1242
      %1426 = vmatpush.msra.mxu0 %v1233
      %1427 = vmatpush.msra.mxu0 %v1224
      %1428 = vmatpush.msra.mxu0 %v1215
      %1429 = vmatpush.msra.mxu0 %v1206
      %1430 = vmatpush.msra.mxu0 %v1197
      %1431 = vmatpush.msra.mxu0 %v1188
      %1432 = vmatpush.msra.mxu0 %v1179
      %1433 = vmatpush.msra.mxu0 %v1170
      %1434 = vmatpush.msra.mxu0 %v1161
      %1435 = vmatpush.msra.mxu0 %v1152
      %1436 = vmatpush.msra.mxu0 %v1143
      %1437 = vmatmul.f32.gmra.mxu0 %v1141
      %v1438 = vpop.f32.mrf.mxu0
      %v1439 = vadd.f32 %v1399, %v1438
      %1440 = vdwg.mxu0
      %1441 = vmatpush.msra.mxu0 0.0
      %1442 = vmatpush.msra.mxu0 0.0
      %1443 = vmatpush.msra.mxu0 0.0
      %1444 = vmatpush.msra.mxu0 0.0
      %1445 = vmatpush.msra.mxu0 %v1386
      %1446 = vmatpush.msra.mxu0 %v1377
      %1447 = vmatpush.msra.mxu0 %v1368
      %1448 = vmatpush.msra.mxu0 %v1359
      %1449 = vmatpush.msra.mxu0 %v1350
      %1450 = vmatpush.msra.mxu0 %v1341
      %1451 = vmatpush.msra.mxu0 %v1332
      %1452 = vmatpush.msra.mxu0 %v1323
      %1453 = vmatpush.msra.mxu0 %v1314
      %1454 = vmatpush.msra.mxu0 %v1305
      %1455 = vmatpush.msra.mxu0 %v1296
      %1456 = vmatpush.msra.mxu0 %v1287
      %1457 = vmatmul.f32.gmra.mxu0 %v1419
      %v1458 = vpop.f32.mrf.mxu0
      %v1459 = vadd.f32 %v1439, %v1458
      %1460 = vdwg.mxu0
      %1461 = vmatpush.msra.mxu0 %v1279
      %1462 = vmatpush.msra.mxu0 %v1270
      %1463 = vmatpush.msra.mxu0 %v1261
      %1464 = vmatpush.msra.mxu0 %v1252
      %1465 = vmatpush.msra.mxu0 %v1243
      %1466 = vmatpush.msra.mxu0 %v1234
      %1467 = vmatpush.msra.mxu0 %v1225
      %1468 = vmatpush.msra.mxu0 %v1216
      %1469 = vmatpush.msra.mxu0 %v1207
      %1470 = vmatpush.msra.mxu0 %v1198
      %1471 = vmatpush.msra.mxu0 %v1189
      %1472 = vmatpush.msra.mxu0 %v1180
      %1473 = vmatpush.msra.mxu0 %v1171
      %1474 = vmatpush.msra.mxu0 %v1162
      %1475 = vmatpush.msra.mxu0 %v1153
      %1476 = vmatpush.msra.mxu0 %v1144
      %1477 = vmatmul.f32.gmra.mxu0 %v1141
      %v1478 = vpop.f32.mrf.mxu0
      %v1479 = vadd.f32 %v1400, %v1478
      %1480 = vdwg.mxu0
      %1481 = vmatpush.msra.mxu0 0.0
      %1482 = vmatpush.msra.mxu0 0.0
      %1483 = vmatpush.msra.mxu0 0.0
      %1484 = vmatpush.msra.mxu0 0.0
      %1485 = vmatpush.msra.mxu0 %v1387
      %1486 = vmatpush.msra.mxu0 %v1378
      %1487 = vmatpush.msra.mxu0 %v1369
      %1488 = vmatpush.msra.mxu0 %v1360
      %1489 = vmatpush.msra.mxu0 %v1351
      %1490 = vmatpush.msra.mxu0 %v1342
      %1491 = vmatpush.msra.mxu0 %v1333
      %1492 = vmatpush.msra.mxu0 %v1324
      %1493 = vmatpush.msra.mxu0 %v1315
      %1494 = vmatpush.msra.mxu0 %v1306
      %1495 = vmatpush.msra.mxu0 %v1297
      %1496 = vmatpush.msra.mxu0 %v1288
      %1497 = vmatmul.f32.gmra.mxu0 %v1419
      %v1498 = vpop.f32.mrf.mxu0
      %v1499 = vadd.f32 %v1479, %v1498
      %1500 = vdwg.mxu0
      %1501 = vmatpush.msra.mxu0 %v1280
      %1502 = vmatpush.msra.mxu0 %v1271
      %1503 = vmatpush.msra.mxu0 %v1262
      %1504 = vmatpush.msra.mxu0 %v1253
      %1505 = vmatpush.msra.mxu0 %v1244
      %1506 = vmatpush.msra.mxu0 %v1235
      %1507 = vmatpush.msra.mxu0 %v1226
      %1508 = vmatpush.msra.mxu0 %v1217
      %1509 = vmatpush.msra.mxu0 %v1208
      %1510 = vmatpush.msra.mxu0 %v1199
      %1511 = vmatpush.msra.mxu0 %v1190
      %1512 = vmatpush.msra.mxu0 %v1181
      %1513 = vmatpush.msra.mxu0 %v1172
      %1514 = vmatpush.msra.mxu0 %v1163
      %1515 = vmatpush.msra.mxu0 %v1154
      %1516 = vmatpush.msra.mxu0 %v1145
      %1517 = vmatmul.f32.gmra.mxu0 %v1141
      %v1518 = vpop.f32.mrf.mxu0
      %v1519 = vadd.f32 %v1401, %v1518
      %1520 = vdwg.mxu0
      %1521 = vmatpush.msra.mxu0 0.0
      %1522 = vmatpush.msra.mxu0 0.0
      %1523 = vmatpush.msra.mxu0 0.0
      %1524 = vmatpush.msra.mxu0 0.0
      %1525 = vmatpush.msra.mxu0 %v1388
      %1526 = vmatpush.msra.mxu0 %v1379
      %1527 = vmatpush.msra.mxu0 %v1370
      %1528 = vmatpush.msra.mxu0 %v1361
      %1529 = vmatpush.msra.mxu0 %v1352
      %1530 = vmatpush.msra.mxu0 %v1343
      %1531 = vmatpush.msra.mxu0 %v1334
      %1532 = vmatpush.msra.mxu0 %v1325
      %1533 = vmatpush.msra.mxu0 %v1316
      %1534 = vmatpush.msra.mxu0 %v1307
      %1535 = vmatpush.msra.mxu0 %v1298
      %1536 = vmatpush.msra.mxu0 %v1289
      %1537 = vmatmul.f32.gmra.mxu0 %v1419
      %v1538 = vpop.f32.mrf.mxu0
      %v1539 = vadd.f32 %v1519, %v1538
      %1540 = vdwg.mxu0
      %1541 = vmatpush.msra.mxu0 %v1281
      %1542 = vmatpush.msra.mxu0 %v1272
      %1543 = vmatpush.msra.mxu0 %v1263
      %1544 = vmatpush.msra.mxu0 %v1254
      %1545 = vmatpush.msra.mxu0 %v1245
      %1546 = vmatpush.msra.mxu0 %v1236
      %1547 = vmatpush.msra.mxu0 %v1227
      %1548 = vmatpush.msra.mxu0 %v1218
      %1549 = vmatpush.msra.mxu0 %v1209
      %1550 = vmatpush.msra.mxu0 %v1200
      %1551 = vmatpush.msra.mxu0 %v1191
      %1552 = vmatpush.msra.mxu0 %v1182
      %1553 = vmatpush.msra.mxu0 %v1173
      %1554 = vmatpush.msra.mxu0 %v1164
      %1555 = vmatpush.msra.mxu0 %v1155
      %1556 = vmatpush.msra.mxu0 %v1146
      %1557 = vmatmul.f32.gmra.mxu0 %v1141
      %v1558 = vpop.f32.mrf.mxu0
      %v1559 = vadd.f32 %v1402, %v1558
      %1560 = vdwg.mxu0
      %1561 = vmatpush.msra.mxu0 0.0
      %1562 = vmatpush.msra.mxu0 0.0
      %1563 = vmatpush.msra.mxu0 0.0
      %1564 = vmatpush.msra.mxu0 0.0
      %1565 = vmatpush.msra.mxu0 %v1389
      %1566 = vmatpush.msra.mxu0 %v1380
      %1567 = vmatpush.msra.mxu0 %v1371
      %1568 = vmatpush.msra.mxu0 %v1362
      %1569 = vmatpush.msra.mxu0 %v1353
      %1570 = vmatpush.msra.mxu0 %v1344
      %1571 = vmatpush.msra.mxu0 %v1335
      %1572 = vmatpush.msra.mxu0 %v1326
      %1573 = vmatpush.msra.mxu0 %v1317
      %1574 = vmatpush.msra.mxu0 %v1308
      %1575 = vmatpush.msra.mxu0 %v1299
      %1576 = vmatpush.msra.mxu0 %v1290
      %1577 = vmatmul.f32.gmra.mxu0 %v1419
      %v1578 = vpop.f32.mrf.mxu0
      %v1579 = vadd.f32 %v1559, %v1578
      %1580 = vdwg.mxu0
      %1581 = vmatpush.msra.mxu0 %v1282
      %1582 = vmatpush.msra.mxu0 %v1273
      %1583 = vmatpush.msra.mxu0 %v1264
      %1584 = vmatpush.msra.mxu0 %v1255
      %1585 = vmatpush.msra.mxu0 %v1246
      %1586 = vmatpush.msra.mxu0 %v1237
      %1587 = vmatpush.msra.mxu0 %v1228
      %1588 = vmatpush.msra.mxu0 %v1219
      %1589 = vmatpush.msra.mxu0 %v1210
      %1590 = vmatpush.msra.mxu0 %v1201
      %1591 = vmatpush.msra.mxu0 %v1192
      %1592 = vmatpush.msra.mxu0 %v1183
      %1593 = vmatpush.msra.mxu0 %v1174
      %1594 = vmatpush.msra.mxu0 %v1165
      %1595 = vmatpush.msra.mxu0 %v1156
      %1596 = vmatpush.msra.mxu0 %v1147
      %1597 = vmatmul.f32.gmra.mxu0 %v1141
      %v1598 = vpop.f32.mrf.mxu0
      %v1599 = vadd.f32 %v1403, %v1598
      %1600 = vdwg.mxu0
      %1601 = vmatpush.msra.mxu0 0.0
      %1602 = vmatpush.msra.mxu0 0.0
      %1603 = vmatpush.msra.mxu0 0.0
      %1604 = vmatpush.msra.mxu0 0.0
      %1605 = vmatpush.msra.mxu0 %v1390
      %1606 = vmatpush.msra.mxu0 %v1381
      %1607 = vmatpush.msra.mxu0 %v1372
      %1608 = vmatpush.msra.mxu0 %v1363
      %1609 = vmatpush.msra.mxu0 %v1354
      %1610 = vmatpush.msra.mxu0 %v1345
      %1611 = vmatpush.msra.mxu0 %v1336
      %1612 = vmatpush.msra.mxu0 %v1327
      %1613 = vmatpush.msra.mxu0 %v1318
      %1614 = vmatpush.msra.mxu0 %v1309
      %1615 = vmatpush.msra.mxu0 %v1300
      %1616 = vmatpush.msra.mxu0 %v1291
      %1617 = vmatmul.f32.gmra.mxu0 %v1419
      %v1618 = vpop.f32.mrf.mxu0
      %v1619 = vadd.f32 %v1599, %v1618
      %1620 = vdwg.mxu0
      %1621 = vmatpush.msra.mxu0 %v1283
      %1622 = vmatpush.msra.mxu0 %v1274
      %1623 = vmatpush.msra.mxu0 %v1265
      %1624 = vmatpush.msra.mxu0 %v1256
      %1625 = vmatpush.msra.mxu0 %v1247
      %1626 = vmatpush.msra.mxu0 %v1238
      %1627 = vmatpush.msra.mxu0 %v1229
      %1628 = vmatpush.msra.mxu0 %v1220
      %1629 = vmatpush.msra.mxu0 %v1211
      %1630 = vmatpush.msra.mxu0 %v1202
      %1631 = vmatpush.msra.mxu0 %v1193
      %1632 = vmatpush.msra.mxu0 %v1184
      %1633 = vmatpush.msra.mxu0 %v1175
      %1634 = vmatpush.msra.mxu0 %v1166
      %1635 = vmatpush.msra.mxu0 %v1157
      %1636 = vmatpush.msra.mxu0 %v1148
      %1637 = vmatmul.f32.gmra.mxu0 %v1141
      %v1638 = vpop.f32.mrf.mxu0
      %v1639 = vadd.f32 %v1404, %v1638
      %1640 = vdwg.mxu0
      %1641 = vmatpush.msra.mxu0 0.0
      %1642 = vmatpush.msra.mxu0 0.0
      %1643 = vmatpush.msra.mxu0 0.0
      %1644 = vmatpush.msra.mxu0 0.0
      %1645 = vmatpush.msra.mxu0 %v1391
      %1646 = vmatpush.msra.mxu0 %v1382
      %1647 = vmatpush.msra.mxu0 %v1373
      %1648 = vmatpush.msra.mxu0 %v1364
      %1649 = vmatpush.msra.mxu0 %v1355
      %1650 = vmatpush.msra.mxu0 %v1346
      %1651 = vmatpush.msra.mxu0 %v1337
      %1652 = vmatpush.msra.mxu0 %v1328
      %1653 = vmatpush.msra.mxu0 %v1319
      %1654 = vmatpush.msra.mxu0 %v1310
      %1655 = vmatpush.msra.mxu0 %v1301
      %1656 = vmatpush.msra.mxu0 %v1292
      %1657 = vmatmul.f32.gmra.mxu0 %v1419
      %v1658 = vpop.f32.mrf.mxu0
      %v1659 = vadd.f32 %v1639, %v1658
      %1660 = vdwg.mxu0
      %1661 = vmatpush.msra.mxu0 %v1284
      %1662 = vmatpush.msra.mxu0 %v1275
      %1663 = vmatpush.msra.mxu0 %v1266
      %1664 = vmatpush.msra.mxu0 %v1257
      %1665 = vmatpush.msra.mxu0 %v1248
      %1666 = vmatpush.msra.mxu0 %v1239
      %1667 = vmatpush.msra.mxu0 %v1230
      %1668 = vmatpush.msra.mxu0 %v1221
      %1669 = vmatpush.msra.mxu0 %v1212
      %1670 = vmatpush.msra.mxu0 %v1203
      %1671 = vmatpush.msra.mxu0 %v1194
      %1672 = vmatpush.msra.mxu0 %v1185
      %1673 = vmatpush.msra.mxu0 %v1176
      %1674 = vmatpush.msra.mxu0 %v1167
      %1675 = vmatpush.msra.mxu0 %v1158
      %1676 = vmatpush.msra.mxu0 %v1149
      %1677 = vmatmul.f32.gmra.mxu0 %v1141
      %v1678 = vpop.f32.mrf.mxu0
      %v1679 = vadd.f32 %v1405, %v1678
      %1680 = vdwg.mxu0
      %1681 = vmatpush.msra.mxu0 0.0
      %1682 = vmatpush.msra.mxu0 0.0
      %1683 = vmatpush.msra.mxu0 0.0
      %1684 = vmatpush.msra.mxu0 0.0
      %1685 = vmatpush.msra.mxu0 %v1392
      %1686 = vmatpush.msra.mxu0 %v1383
      %1687 = vmatpush.msra.mxu0 %v1374
      %1688 = vmatpush.msra.mxu0 %v1365
      %1689 = vmatpush.msra.mxu0 %v1356
      %1690 = vmatpush.msra.mxu0 %v1347
      %1691 = vmatpush.msra.mxu0 %v1338
      %1692 = vmatpush.msra.mxu0 %v1329
      %1693 = vmatpush.msra.mxu0 %v1320
      %1694 = vmatpush.msra.mxu0 %v1311
      %1695 = vmatpush.msra.mxu0 %v1302
      %1696 = vmatpush.msra.mxu0 %v1293
      %1697 = vmatmul.f32.gmra.mxu0 %v1419
      %v1698 = vpop.f32.mrf.mxu0
      %v1699 = vadd.f32 %v1679, %v1698
      %1700 = vdwg.mxu0
      %1701 = vmatpush.msra.mxu0 %v1285
      %1702 = vmatpush.msra.mxu0 %v1276
      %1703 = vmatpush.msra.mxu0 %v1267
      %1704 = vmatpush.msra.mxu0 %v1258
      %1705 = vmatpush.msra.mxu0 %v1249
      %1706 = vmatpush.msra.mxu0 %v1240
      %1707 = vmatpush.msra.mxu0 %v1231
      %1708 = vmatpush.msra.mxu0 %v1222
      %1709 = vmatpush.msra.mxu0 %v1213
      %1710 = vmatpush.msra.mxu0 %v1204
      %1711 = vmatpush.msra.mxu0 %v1195
      %1712 = vmatpush.msra.mxu0 %v1186
      %1713 = vmatpush.msra.mxu0 %v1177
      %1714 = vmatpush.msra.mxu0 %v1168
      %1715 = vmatpush.msra.mxu0 %v1159
      %1716 = vmatpush.msra.mxu0 %v1150
      %1717 = vmatmul.f32.gmra.mxu0 %v1141
      %v1718 = vpop.f32.mrf.mxu0
      %v1719 = vadd.f32 %v1406, %v1718
      %1720 = vdwg.mxu0
      %1721 = vmatpush.msra.mxu0 0.0
      %1722 = vmatpush.msra.mxu0 0.0
      %1723 = vmatpush.msra.mxu0 0.0
      %1724 = vmatpush.msra.mxu0 0.0
      %1725 = vmatpush.msra.mxu0 %v1393
      %1726 = vmatpush.msra.mxu0 %v1384
      %1727 = vmatpush.msra.mxu0 %v1375
      %1728 = vmatpush.msra.mxu0 %v1366
      %1729 = vmatpush.msra.mxu0 %v1357
      %1730 = vmatpush.msra.mxu0 %v1348
      %1731 = vmatpush.msra.mxu0 %v1339
      %1732 = vmatpush.msra.mxu0 %v1330
      %1733 = vmatpush.msra.mxu0 %v1321
      %1734 = vmatpush.msra.mxu0 %v1312
      %1735 = vmatpush.msra.mxu0 %v1303
      %1736 = vmatpush.msra.mxu0 %v1294
      %1737 = vmatmul.f32.gmra.mxu0 %v1419
      %v1738 = vpop.f32.mrf.mxu0
      %v1739 = vadd.f32 %v1719, %v1738
      %1740 = vdwg.mxu0
      %1741 = vmatpush.msra.mxu0 %v1286
      %1742 = vmatpush.msra.mxu0 %v1277
      %1743 = vmatpush.msra.mxu0 %v1268
      %1744 = vmatpush.msra.mxu0 %v1259
      %1745 = vmatpush.msra.mxu0 %v1250
      %1746 = vmatpush.msra.mxu0 %v1241
      %1747 = vmatpush.msra.mxu0 %v1232
      %1748 = vmatpush.msra.mxu0 %v1223
      %1749 = vmatpush.msra.mxu0 %v1214
      %1750 = vmatpush.msra.mxu0 %v1205
      %1751 = vmatpush.msra.mxu0 %v1196
      %1752 = vmatpush.msra.mxu0 %v1187
      %1753 = vmatpush.msra.mxu0 %v1178
      %1754 = vmatpush.msra.mxu0 %v1169
      %1755 = vmatpush.msra.mxu0 %v1160
      %1756 = vmatpush.msra.mxu0 %v1151
      %1757 = vmatmul.f32.gmra.mxu0 %v1141
      %v1758 = vpop.f32.mrf.mxu0
      %v1759 = vadd.f32 %v1407, %v1758
      %1760 = vdwg.mxu0
      %1761 = vmatpush.msra.mxu0 0.0
      %1762 = vmatpush.msra.mxu0 0.0
      %1763 = vmatpush.msra.mxu0 0.0
      %1764 = vmatpush.msra.mxu0 0.0
      %1765 = vmatpush.msra.mxu0 %v1394
      %1766 = vmatpush.msra.mxu0 %v1385
      %1767 = vmatpush.msra.mxu0 %v1376
      %1768 = vmatpush.msra.mxu0 %v1367
      %1769 = vmatpush.msra.mxu0 %v1358
      %1770 = vmatpush.msra.mxu0 %v1349
      %1771 = vmatpush.msra.mxu0 %v1340
      %1772 = vmatpush.msra.mxu0 %v1331
      %1773 = vmatpush.msra.mxu0 %v1322
      %1774 = vmatpush.msra.mxu0 %v1313
      %1775 = vmatpush.msra.mxu0 %v1304
      %1776 = vmatpush.msra.mxu0 %v1295
      %1777 = vmatmul.f32.gmra.mxu0 %v1419
      %v1778 = vpop.f32.mrf.mxu0
      %v1779 = vadd.f32 %v1759, %v1778
      %1780 = vdwg.mxu0
      %v1781 = vxor.u32 %v1579, 2147483648
      %v1782 = vxor.u32 %v1619, 2147483648
      %v1783 = vxor.u32 %v1659, 2147483648
      %v1784 = vmul.f32 %v1781, 1.442695
      %v1785 = vpow.pop %v1784
      %v1786 = vmul.f32 %v1782, 1.442695
      %v1787 = vpow.pop %v1786
      %v1788 = vmul.f32 %v1783, 1.442695
      %v1789 = vpow.pop %v1788
      %v1790 = vadd.f32 %v1785, 1.0
      %v1791 = vadd.f32 %v1787, 1.0
      %v1792 = vadd.f32 %v1789, 1.0
      %v1793 = vrcp.pop %v1790
      %v1794 = vmul.f32 %v1790, %v1793
      %v1795 = vsub.f32 1.0, %v1794
      %v1796 = vmul.f32 %v1793, %v1795
      %v1797 = vadd.f32 %v1793, %v1796
      %vm1798 = vweird.f32 %v1790
      %vm1799 = vweird.f32 %v1793
      %vm1800 = vmor %vm1798, %vm1799
      %v1801 = vsel %vm1800, %v1793, %v1797
      %v1802 = vand.u32 2147483647, %v1790
      %vm1803 = vcmp.eq.f32.partialorder %v1802, 8.507059e+37
      %v1804 = vand.u32 %v1790, 2147483648
      %v1805 = vor.u32 1.1754944e-38, %v1804
      %v1806 = vsel %vm1803, %v1805, %v1801
      %v1807 = vmul.f32 1.0, %v1806
      %v1808 = vrcp.pop %v1791
      %v1809 = vmul.f32 %v1791, %v1808
      %v1810 = vsub.f32 1.0, %v1809
      %v1811 = vmul.f32 %v1808, %v1810
      %v1812 = vadd.f32 %v1808, %v1811
      %vm1813 = vweird.f32 %v1791
      %vm1814 = vweird.f32 %v1808
      %vm1815 = vmor %vm1813, %vm1814
      %v1816 = vsel %vm1815, %v1808, %v1812
      %v1817 = vand.u32 2147483647, %v1791
      %vm1818 = vcmp.eq.f32.partialorder %v1817, 8.507059e+37
      %v1819 = vand.u32 %v1791, 2147483648
      %v1820 = vor.u32 1.1754944e-38, %v1819
      %v1821 = vsel %vm1818, %v1820, %v1816
      %v1822 = vmul.f32 1.0, %v1821
      %v1823 = vrcp.pop %v1792
      %v1824 = vmul.f32 %v1792, %v1823
      %v1825 = vsub.f32 1.0, %v1824
      %v1826 = vmul.f32 %v1823, %v1825
      %v1827 = vadd.f32 %v1823, %v1826
      %vm1828 = vweird.f32 %v1792
      %vm1829 = vweird.f32 %v1823
      %vm1830 = vmor %vm1828, %vm1829
      %v1831 = vsel %vm1830, %v1823, %v1827
      %v1832 = vand.u32 2147483647, %v1792
      %vm1833 = vcmp.eq.f32.partialorder %v1832, 8.507059e+37
      %v1834 = vand.u32 %v1792, 2147483648
      %v1835 = vor.u32 1.1754944e-38, %v1834
      %v1836 = vsel %vm1833, %v1835, %v1831
      %v1837 = vmul.f32 1.0, %v1836
      %v1838 = vmul.f32 %v1459, %v1807
      %v1839 = vmul.f32 %v1499, %v1822
      %v1840 = vmul.f32 %v1539, %v1837
      %v1841 = vadd.f32 %v1838, %v1699
      %v1842 = vadd.f32 %v1839, %v1739
      %v1843 = vadd.f32 %v1840, %v1779
      %v1844 = vmax.f32 %v1841, 0.0
      %v1845 = vmax.f32 %v1842, 0.0
      %v1846 = vmax.f32 %v1843, 0.0
      %1847 = vst [vmem:[%s342] sm:$0xff] %v1844
      %1848 = vst [vmem:[%s342 + $0x8] sm:$0xff] %v1845
      %1849 = vst [vmem:[%s342 + $0x10] sm:$0xff] %v1846
      %v1850 = vadd.f32 %v1844, %v1845
      %v1851 = vadd.f32 %v1850, %v1846
      %1852 = vadd.xlane.f32.xlu0 %v1851
      %v1853 = vpop.xlane.xlu0 %1852
      %vm1854 = vcmask 7168
      %1855 = vst.msk [vmem:[%s346] sm:$0xff] %vm1854, %v1853
      %v1856 = vmul.f32 %v1844, %v1844
      %v1857 = vmul.f32 %v1845, %v1845
      %v1858 = vmul.f32 %v1846, %v1846
      %v1859 = vadd.f32 %v1856, %v1857
      %v1860 = vadd.f32 %v1859, %v1858
      %1861 = vadd.xlane.f32.xlu0 %v1860
      %v1862 = vpop.xlane.xlu0 %1861
      %1863 = vst.msk [vmem:[%s350] sm:$0xff] %vm1854, %v1862
      %p1864 = scmp.lt.s32.totalorder %s21, 1
      %s1865 = scalar_select %p1864, %s21, 1
      %s1866 = smul.addr %s1865, 3
      %s1867 = smul.addr %s1866, 8
      %s1868 = scalar_lea.vmem %s7, %s1867
      %p1869 = scmp.lt.s32.totalorder %s21, 1
      %s1870 = scalar_select %p1869, %s21, 1
      %s1871 = smul.addr %s1870, 8
      %s1872 = scalar_lea.vmem %s8, %s1871
      %p1873 = scmp.lt.s32.totalorder %s21, 1
      %s1874 = scalar_select %p1873, %s21, 1
      %s1875 = smul.addr %s1874, 8
      %s1876 = scalar_lea.vmem %s9, %s1875
      // Predicated region
      $region49: #{tcn_forward.2} parent=47 // pred_check
        %p1877 = pneg %p191
      $region50: #{tcn_forward.2} parent=47 // pred_check_branch
        %1879 = sbr.rel (%p1877) target = $region52
      $region51: #{tcn_forward.2} parent=47 // pred_region
        _
      $region52: #{tcn_forward.2} parent=47 // pred_fallthru
        _
      // Predicated region
      $region53: #{tcn_forward.2} parent=47 // pred_check
        %p1880 = pneg %p217
      $region54: #{tcn_forward.2} parent=47 // pred_check_branch
        %1882 = sbr.rel (%p1880) target = $region56
      $region55: #{tcn_forward.2} parent=47 // pred_region
        _
      $region56: #{tcn_forward.2} parent=47 // pred_fallthru
        _
      // Predicated region
      $region57: #{tcn_forward.2} parent=47 // pred_check
        %p1883 = pneg %p243
      $region58: #{tcn_forward.2} parent=47 // pred_check_branch
        %1885 = sbr.rel (%p1883) target = $region60
      $region59: #{tcn_forward.2} parent=47 // pred_region
        _
      $region60: #{tcn_forward.2} parent=47 // pred_fallthru
        _
    $region48: #{tcn_forward.2} parent=5 // pred_fallthru
      _
    %p1886 = scmp.le.s32.totalorder 2, %s16
    // Predicated region
    $region61: #{tcn_forward.2} parent=5 // pred_check
      %p1887 = pneg %p1886
    $region62: #{tcn_forward.2} parent=5 // pred_check_branch
      %1889 = sbr.rel (%p1887) target = $region64
    $region63: #{tcn_forward.2} parent=5 // pred_region
      %s1890 = ssub.s32 %s16, 2
      // Predicated region
      $region65: #{tcn_forward.2} parent=63 // pred_check
        %p1891 = pneg %p197
      $region66: #{tcn_forward.2} parent=63 // pred_check_branch
        %1893 = sbr.rel (%p1891) target = $region68
      $region67: #{tcn_forward.2} parent=63 // pred_region
        %p1894 = scmp.lt.s32.totalorder %s22, 1
        %s1895 = scalar_select %p1894, %s22, 1
        %s1896 = smul.addr %s1895, 3
        %s1897 = smul.addr %s1896, 8
        %s1898 = scalar_lea.vmem %s7, %s1897
      $region68: #{tcn_forward.2} parent=63 // pred_fallthru
        _
      // Predicated region
      $region69: #{tcn_forward.2} parent=63 // pred_check
        %p1899 = pneg %p223
      $region70: #{tcn_forward.2} parent=63 // pred_check_branch
        %1901 = sbr.rel (%p1899) target = $region72
      $region71: #{tcn_forward.2} parent=63 // pred_region
        %p1902 = scmp.lt.s32.totalorder %s22, 1
        %s1903 = scalar_select %p1902, %s22, 1
        %s1904 = smul.addr %s1903, 8
        %s1905 = scalar_lea.vmem %s8, %s1904
      $region72: #{tcn_forward.2} parent=63 // pred_fallthru
        _
      // Predicated region
      $region73: #{tcn_forward.2} parent=63 // pred_check
        %p1906 = pneg %p249
      $region74: #{tcn_forward.2} parent=63 // pred_check_branch
        %1908 = sbr.rel (%p1906) target = $region76
      $region75: #{tcn_forward.2} parent=63 // pred_region
        %p1909 = scmp.lt.s32.totalorder %s22, 1
        %s1910 = scalar_select %p1909, %s22, 1
        %s1911 = smul.addr %s1910, 8
        %s1912 = scalar_lea.vmem %s9, %s1911
      $region76: #{tcn_forward.2} parent=63 // pred_fallthru
        _
    $region64: #{tcn_forward.2} parent=5 // pred_fallthru
      _
  $region6: #{tcn_forward.2} parent=0 // loop_footer
    %s20 = sadd.s32 1, %s16
  $region7: #{tcn_forward.2} parent=0 // loop_footer_branch
    %15 = sbr.rel target = $region3
  $region8: #{tcn_forward.2} parent=0 // loop_exit
    _

</llo_original>
